<compile_context>
chip_gen: v5e
topology: v5e:2x2
jax: 0.10.0
libtpu: 0.0.40
codegen_flags: <defaults>
</compile_context>

<pallas_src>
import functools

import jax
import jax.numpy as jnp
from jax.experimental import pallas as pl
from jax.experimental.pallas import tpu as pltpu

# Sudoku constants (c.INPUT_SIZE / c.OUTPUT_SIZE): 9x9 board, 9-way one-hot.
INPUT_SIZE = 729
OUTPUT_SIZE = 729


def _round_up(x, m):
    return ((x + m - 1) // m) * m


# ---------------------------------------------------------------------------
# Fused Pallas kernel: one grid step per layer.
#   x_ref   : (Mp, Fmax)      f32   padded input (fetched once, index l-invariant)
#   w_ref   : (1, Fmax, Fmax) bf16  this layer's zero-padded weight slab
#   b_ref   : (1, 1, Fmax)    f32   this layer's zero-padded bias
#   o_ref   : (Mp, Fmax)      f32   final output (written on last layer only)
#   act_ref : (Mp, Fmax)      f32   VMEM-resident activation carried across layers
# ---------------------------------------------------------------------------
def _fused_mlp_kernel(x_ref, w_ref, b_ref, o_ref, act_ref):
    layer = pl.program_id(0)
    n_layers = pl.num_programs(0)

    @pl.when(layer == 0)
    def _():
        act_ref[...] = x_ref[...]

    x = act_ref[...]                      # (Mp, Fmax) f32, loaded before any store
    w = w_ref[0]                          # (Fmax, Fmax) bf16
    b = b_ref[0]                          # (1, Fmax)    f32

    y = jnp.dot(
        x.astype(w.dtype), w, preferred_element_type=jnp.float32
    ) + b                                 # (Mp, Fmax) f32

    @pl.when(layer < n_layers - 1)
    def _():
        act_ref[...] = jnp.maximum(y, 0.0)   # ReLU; zero padding is preserved

    @pl.when(layer == n_layers - 1)
    def _():
        o_ref[...] = y.astype(o_ref.dtype)   # no activation on the final layer


@functools.partial(jax.jit, static_argnames=("out_dim",))
def sudoku_mlp_forward(w_slab, b_slab, x, *, out_dim):
    """Run the fused MLP. w_slab:(L,Fmax,Fmax) bf16, b_slab:(L,1,Fmax) f32,
    x:(M,K) f32 with K <= Fmax.  Returns (M, out_dim) f32."""
    M, K = x.shape
    L, Fmax, _ = w_slab.shape

    Mp = max(8, _round_up(M, 8))
    xp = jnp.pad(x.astype(jnp.float32), ((0, Mp - M), (0, Fmax - K)))

    # VMEM budget: double-buffered weight + bias blocks, in/out blocks, scratch.
    w_blk = Fmax * Fmax * 2               # bf16
    b_blk = Fmax * 4
    io_blk = Mp * Fmax * 4
    need = 2 * (w_blk + b_blk + 2 * io_blk) + io_blk
    vmem_limit = int(max(16 << 20, min(need + (8 << 20), 48 << 20)))

    out = pl.pallas_call(
        _fused_mlp_kernel,
        out_shape=jax.ShapeDtypeStruct((Mp, Fmax), jnp.float32),
        grid_spec=pltpu.PrefetchScalarGridSpec(
            num_scalar_prefetch=0,
            grid=(L,),
            in_specs=[
                pl.BlockSpec((Mp, Fmax), lambda l: (0, 0)),        # input (resident)
                pl.BlockSpec((1, Fmax, Fmax), lambda l: (l, 0, 0)),  # layer weight
                pl.BlockSpec((1, 1, Fmax), lambda l: (l, 0, 0)),     # layer bias
            ],
            out_specs=pl.BlockSpec((Mp, Fmax), lambda l: (0, 0)),
            scratch_shapes=[pltpu.VMEM((Mp, Fmax), jnp.float32)],
        ),
        compiler_params=pltpu.CompilerParams(
            dimension_semantics=("arbitrary",),   # layers are sequentially dependent
            vmem_limit_bytes=vmem_limit,
        ),
    )(xp, w_slab, b_slab)

    return out[:M, :out_dim]


# ---------------------------------------------------------------------------
# Parameter construction (deterministic, PyTorch-default-style uniform init).
# ---------------------------------------------------------------------------
def _mlp_layer_dims(in_size, out_size, n_layers):
    dims = []
    prev = in_size
    for _ in range(n_layers):
        dims.append((prev, out_size))
        prev = out_size
    return dims


def init_sudoku_mlp_params(key, inner_size=512, num_layers=10):
    input_layers_num = int(num_layers / 2)
    output_layers_num = num_layers - input_layers_num
    layer_dims = _mlp_layer_dims(INPUT_SIZE, inner_size, input_layers_num) + \
                 _mlp_layer_dims(inner_size, OUTPUT_SIZE, output_layers_num)

    params = []
    for (fan_in, fan_out) in layer_dims:
        key, kw, kb = jax.random.split(key, 3)
        bound = 1.0 / jnp.sqrt(fan_in)
        w = jax.random.uniform(kw, (fan_in, fan_out), jnp.float32, -bound, bound)
        b = jax.random.uniform(kb, (fan_out,), jnp.float32, -bound, bound)
        params.append((w, b))
    return params


def prepare_fused_params(params):
    """Pad all layers ONCE into uniform slabs (weights bf16, biases f32)."""
    L = len(params)
    max_dim = max(max(w.shape[0], w.shape[1]) for w, _ in params)
    Fmax = _round_up(max(max_dim, 128), 128)

    w_slab = jnp.zeros((L, Fmax, Fmax), jnp.bfloat16)
    b_slab = jnp.zeros((L, 1, Fmax), jnp.float32)
    for i, (w, b) in enumerate(params):
        din, dout = w.shape
        w_slab = w_slab.at[i, :din, :dout].set(w.astype(jnp.bfloat16))
        b_slab = b_slab.at[i, 0, :dout].set(b.astype(jnp.float32))

    out_dim = params[-1][0].shape[1]
    return w_slab, b_slab, out_dim


# ---------------------------------------------------------------------------
# Pure-JAX references.
# ---------------------------------------------------------------------------
def sudoku_mlp_reference(params, x, compute_dtype=jnp.float32):
    n = len(params)
    for i, (w, b) in enumerate(params):
        y = jnp.dot(
            x.astype(compute_dtype), w.astype(compute_dtype),
            preferred_element_type=jnp.float32,
        ) + b.astype(jnp.float32)
        x = jnp.maximum(y, 0.0) if i < n - 1 else y
    return x


if __name__ == "__main__":
    key = jax.random.PRNGKey(0)
    k_params, k_x = jax.random.split(key)

    # Small configuration consistent with the module's forward pass.
    inner_size = 128
    num_layers = 4
    batch = 8

    params = init_sudoku_mlp_params(k_params, inner_size=inner_size,
                                    num_layers=num_layers)
    w_slab, b_slab, out_dim = prepare_fused_params(params)

    x = jax.random.normal(k_x, (batch, INPUT_SIZE), dtype=jnp.float32)

    out = sudoku_mlp_forward(w_slab, b_slab, x, out_dim=out_dim)
    out = jax.block_until_ready(out)

    # Tight check vs a reference using identical bf16-weight math.
    ref_bf16 = sudoku_mlp_reference(params, x, compute_dtype=jnp.bfloat16)
    # Loose sanity check vs the full-f32 module semantics (bf16 weight rounding).
    ref_f32 = sudoku_mlp_reference(params, x, compute_dtype=jnp.float32)

    assert out.shape == (batch, OUTPUT_SIZE)
    assert jnp.allclose(out, ref_bf16, atol=1e-2, rtol=1e-2), "mismatch vs bf16 reference"
    assert jnp.allclose(out, ref_f32, atol=1e-1, rtol=1e-1), "mismatch vs f32 reference"

    print("KERNEL_OK")
</pallas_src>

<mosaic_0001>
module attributes {stable_mosaic.version = 11 : i64} {
  func.func @_fused_mlp_kernel(%arg0: i32, %arg1: memref<8x768xf32, #tpu.memory_space<vmem>>, %arg2: memref<1x768x768xbf16, #tpu.memory_space<vmem>>, %arg3: memref<1x1x768xf32, #tpu.memory_space<vmem>>, %arg4: memref<8x768xf32, #tpu.memory_space<vmem>>, %arg5: memref<8x768xf32, #tpu.memory_space<vmem>>) attributes {dimension_semantics = [#tpu.dimension_semantics<arbitrary>], iteration_bounds = array<i64: 4>, scalar_prefetch = 0 : i64, scratch_operands = 1 : i64, tpu.core_type = #tpu.core_type<tc>, window_params = [{pipeline_mode = #tpu.pipeline_mode<synchronous>, transform_indices = @transform_0, window_bounds = array<i64: 8, 768>}, {transform_indices = @transform_1, window_bounds = array<i64: 1, 768, 768>}, {transform_indices = @transform_2, window_bounds = array<i64: 1, 1, 768>}, {pipeline_mode = #tpu.pipeline_mode<synchronous>, transform_indices = @transform_3, window_bounds = array<i64: 8, 768>}]} {
    %c0_i32 = arith.constant 0 : i32
    %0 = arith.cmpi eq, %arg0, %c0_i32 : i32
    %1 = arith.extui %0 : i1 to i32
    %c0_i32_0 = arith.constant 0 : i32
    %2 = arith.cmpi ne, %1, %c0_i32_0 : i32
    scf.if %2 {
      %c0_11 = arith.constant 0 : index
      %c0_12 = arith.constant 0 : index
      %18 = vector.load %arg1[%c0_11, %c0_12] : memref<8x768xf32, #tpu.memory_space<vmem>>, vector<8x768xf32>
      %c0_13 = arith.constant 0 : index
      %c0_14 = arith.constant 0 : index
      %19 = vector.load %arg5[%c0_13, %c0_14] : memref<8x768xf32, #tpu.memory_space<vmem>>, vector<8x768xf32>
      tpu.vector_store %arg5[%c0_13, %c0_14], %18 {strides = array<i32>} : memref<8x768xf32, #tpu.memory_space<vmem>>, vector<8x768xf32>,
    } else {
    }
    %c0 = arith.constant 0 : index
    %c0_1 = arith.constant 0 : index
    %3 = vector.load %arg5[%c0, %c0_1] : memref<8x768xf32, #tpu.memory_space<vmem>>, vector<8x768xf32>
    %c0_2 = arith.constant 0 : index
    %c0_3 = arith.constant 0 : index
    %c0_4 = arith.constant 0 : index
    %4 = vector.load %arg2[%c0_2, %c0_3, %c0_4] : memref<1x768x768xbf16, #tpu.memory_space<vmem>>, vector<1x768x768xbf16>
    %5 = vector.shape_cast %4 : vector<1x768x768xbf16> to vector<768x768xbf16>
    %c0_5 = arith.constant 0 : index
    %c0_6 = arith.constant 0 : index
    %c0_7 = arith.constant 0 : index
    %6 = vector.load %arg3[%c0_5, %c0_6, %c0_7] : memref<1x1x768xf32, #tpu.memory_space<vmem>>, vector<1x1x768xf32>
    %7 = vector.shape_cast %6 : vector<1x1x768xf32> to vector<1x768xf32>
    %8 = arith.truncf %3 : vector<8x768xf32> to vector<8x768xbf16>
    %cst = arith.constant dense<0.000000e+00> : vector<8x768xf32>
    %9 = tpu.matmul %8, %5, %cst {dimension_numbers = #tpu.dot_dimension_numbers<[1], [0], [0], [1], [0, 0, 1, 1], [], []>} : vector<8x768xbf16>, vector<768x768xbf16>, vector<8x768xf32> -> vector<8x768xf32>
    %10 = vector.broadcast %7 : vector<1x768xf32> to vector<8x768xf32>
    %11 = arith.addf %9, %10 : vector<8x768xf32>
    %c3_i32 = arith.constant 3 : i32
    %12 = arith.cmpi slt, %arg0, %c3_i32 : i32
    %13 = arith.extui %12 : i1 to i32
    %c0_i32_8 = arith.constant 0 : i32
    %14 = arith.cmpi ne, %13, %c0_i32_8 : i32
    scf.if %14 {
      %cst_11 = arith.constant 0.000000e+00 : f32
      %18 = vector.broadcast %cst_11 : f32 to vector<8x768xf32>
      %19 = arith.maximumf %11, %18 : vector<8x768xf32>
      %c0_12 = arith.constant 0 : index
      %c0_13 = arith.constant 0 : index
      %20 = vector.load %arg5[%c0_12, %c0_13] : memref<8x768xf32, #tpu.memory_space<vmem>>, vector<8x768xf32>
      tpu.vector_store %arg5[%c0_12, %c0_13], %19 {strides = array<i32>} : memref<8x768xf32, #tpu.memory_space<vmem>>, vector<8x768xf32>,
    } else {
    }
    %c3_i32_9 = arith.constant 3 : i32
    %15 = arith.cmpi eq, %arg0, %c3_i32_9 : i32
    %16 = arith.extui %15 : i1 to i32
    %c0_i32_10 = arith.constant 0 : i32
    %17 = arith.cmpi ne, %16, %c0_i32_10 : i32
    scf.if %17 {
      %c0_11 = arith.constant 0 : index
      %c0_12 = arith.constant 0 : index
      %18 = vector.load %arg4[%c0_11, %c0_12] : memref<8x768xf32, #tpu.memory_space<vmem>>, vector<8x768xf32>
      tpu.vector_store %arg4[%c0_11, %c0_12], %11 {strides = array<i32>} : memref<8x768xf32, #tpu.memory_space<vmem>>, vector<8x768xf32>,
    } else {
    }
    return
  }
  func.func @transform_0(%arg0: i32) -> (i32, i32) {
    %c0_i32 = arith.constant 0 : i32
    %c0_i32_0 = arith.constant 0 : i32
    %c0_i32_1 = arith.constant 0 : i32
    return %c0_i32, %c0_i32_0 : i32, i32
  }
  func.func @transform_1(%arg0: i32) -> (i32, i32, i32) {
    %c0_i32 = arith.constant 0 : i32
    %c0_i32_0 = arith.constant 0 : i32
    %c0_i32_1 = arith.constant 0 : i32
    return %arg0, %c0_i32, %c0_i32_0 : i32, i32, i32
  }
  func.func @transform_2(%arg0: i32) -> (i32, i32, i32) {
    %c0_i32 = arith.constant 0 : i32
    %c0_i32_0 = arith.constant 0 : i32
    %c0_i32_1 = arith.constant 0 : i32
    return %arg0, %c0_i32, %c0_i32_0 : i32, i32, i32
  }
  func.func @transform_3(%arg0: i32) -> (i32, i32) {
    %c0_i32 = arith.constant 0 : i32
    %c0_i32_0 = arith.constant 0 : i32
    %c0_i32_1 = arith.constant 0 : i32
    return %c0_i32, %c0_i32_0 : i32, i32
  }
}

</mosaic_0001>

<llo_original>
// kernel: sudoku_mlp_forward.1
$region0: #{sudoku_mlp_forward.1}
  #allocation0 [shape = 'u32[]', space=smem, size = 0x4, offset = 0x4, fixed_abs, tag = 'smem constant byte address 0x4 - core index']
  #allocation1 [shape = 'u32[72,128]{1,0:T(1,128)}', space=vmem, size = 0x9000, scoped, tag = 'internal scratch']
  #allocation2 [shape = 'f32[8,768]{1,0:T(8,128)}', space=vmem, size = 0x6000, scoped, tag = 'scratch operand']
  %s0 = inlined_call_operand.vmem [shape: f32[8,768], index: 0, kind: input, shape index: {}]
  %s1 = inlined_call_operand.hbm [shape: bf16[4,768,768], index: 1, kind: input, shape index: {}]
  %s2 = inlined_call_operand.hbm [shape: f32[4,1,768], index: 2, kind: input, shape index: {}]
  %s3 = inlined_call_operand.hbm [shape: f32[8,768], index: 3, kind: output, shape index: {}]
  %s4 = sld [smem:[#allocation0]]
  $region65: #{sudoku_mlp_forward.1} parent=0
    _
  %s6 = ssub.s32 1, %s4
  %s7 = scalar_select 0, %s6, %s4
  $region1: #{sudoku_mlp_forward.1} parent=0
    #allocation3 [shape = 'u8[2359296]{0}', space=vmem, size = 0x240000, scoped, tag = 'input window, operand 1']
    #allocation4 [shape = 's32[2]{0}', space=sflag, size = 0x8, scoped, tag = 'scoped memory for sudoku_mlp_forward.1']
    #allocation5 [shape = 's32[2]{0}', space=sflag, size = 0x8, scoped, tag = 'scoped memory for sudoku_mlp_forward.1']
    #allocation6 [shape = 'u8[6144]{0}', space=vmem, size = 0x1800, scoped, tag = 'input window, operand 2']
    #allocation7 [shape = 's32[2]{0}', space=sflag, size = 0x8, scoped, tag = 'scoped memory for sudoku_mlp_forward.1']
    #allocation8 [shape = 'u8[24576]{0}', space=vmem, size = 0x6000, scoped, tag = 'output window, operand 0, single buffered']
    %8 = vsyncpa [#allocation4], 0
    %s9 = scalar_lea.sflag [#allocation4], 1
    %10 = vsyncpa %s9, 0
    %11 = vsyncpa [#allocation7], 0
    %s12 = scalar_lea.sflag [#allocation7], 1
    %13 = vsyncpa %s12, 0
    %14 = vsyncpa [#allocation5], 0
    loop: start=0, step=1, limit=6
    $region2: #{sudoku_mlp_forward.1} parent=1 // loop_pre_header
      _
    $region3: #{sudoku_mlp_forward.1} parent=1 // loop_header
      %s16 = sphi 0, %s20
      %p17 = scmp.ge.s32.totalorder %s16, 6
      %s24 = sphi 0, %s24
      %s26 = sphi 0, %s24
      %s27 = sphi 0, %s26
      %s41 = sphi 0, %s27
      %s47 = sphi 0, %s49
      %s50 = sphi 0, %s47
      %s51 = sphi 0, %s50
      %s67 = sphi 0, %s51
      %s73 = sphi 0, %s75
      %s76 = sphi 0, %s73
      %s77 = sphi 0, %s76
      %s93 = sphi 0, %s77
      %s97 = sphi 0, %s97
      %s99 = sphi 0, %s97
      %s100 = sphi 0, %s99
      %s114 = sphi 0, %s100
    $region4: #{sudoku_mlp_forward.1} parent=1 // loop_header_branch
      %19 = sbr.rel (%p17) target = $region8
    $region5: #{sudoku_mlp_forward.1} parent=1 // loop_body
      %s21 = ssub.s32 %s16, 1
      %s22 = ssub.s32 %s16, 2
      %s23 = sadd.s32 %s16, 1
      %s25 = sadd.s32 %s24, 1
      %p28 = scmp.eq.s32.totalorder %s16, 3
      %p29 = scmp.ne.s32.totalorder %s24, %s26
      %p30 = scmp.eq.s32.totalorder %s16, 0
      %p31 = por %p29, %p30
      %p32 = scmp.ne.s32.totalorder %s24, %s26
      %p33 = scmp.eq.s32.totalorder %s21, 3
      %p34 = por %p32, %p33
      %p35 = scmp.ne.s32.totalorder %s26, %s27
      %p36 = scmp.eq.s32.totalorder %s21, 0
      %p37 = por %p35, %p36
      %p38 = scmp.ne.s32.totalorder %s26, %s27
      %p39 = scmp.eq.s32.totalorder %s22, 3
      %p40 = por %p38, %p39
      %p42 = scmp.ne.s32.totalorder %s27, %s41
      %p43 = scmp.eq.s32.totalorder %s22, 0
      %p44 = por %p42, %p43
      %s45 = ssub.s32 %s16, %s23
      %p46 = scmp.eq.s32.totalorder %s45, 0
      %s48 = sadd.s32 %s47, 1
      %s49 = scalar_select %p46, %s47, %s48
      %p52 = pneg %p46
      %p53 = scmp.eq.s32.totalorder %s16, 3
      %p54 = por %p52, %p53
      %p55 = scmp.ne.s32.totalorder %s47, %s50
      %p56 = scmp.eq.s32.totalorder %s16, 0
      %p57 = por %p55, %p56
      %p58 = scmp.ne.s32.totalorder %s47, %s50
      %p59 = scmp.eq.s32.totalorder %s21, 3
      %p60 = por %p58, %p59
      %p61 = scmp.ne.s32.totalorder %s50, %s51
      %p62 = scmp.eq.s32.totalorder %s21, 0
      %p63 = por %p61, %p62
      %p64 = scmp.ne.s32.totalorder %s50, %s51
      %p65 = scmp.eq.s32.totalorder %s22, 3
      %p66 = por %p64, %p65
      %p68 = scmp.ne.s32.totalorder %s51, %s67
      %p69 = scmp.eq.s32.totalorder %s22, 0
      %p70 = por %p68, %p69
      %s71 = ssub.s32 %s16, %s23
      %p72 = scmp.eq.s32.totalorder %s71, 0
      %s74 = sadd.s32 %s73, 1
      %s75 = scalar_select %p72, %s73, %s74
      %p78 = pneg %p72
      %p79 = scmp.eq.s32.totalorder %s16, 3
      %p80 = por %p78, %p79
      %p81 = scmp.ne.s32.totalorder %s73, %s76
      %p82 = scmp.eq.s32.totalorder %s16, 0
      %p83 = por %p81, %p82
      %p84 = scmp.ne.s32.totalorder %s73, %s76
      %p85 = scmp.eq.s32.totalorder %s21, 3
      %p86 = por %p84, %p85
      %p87 = scmp.ne.s32.totalorder %s76, %s77
      %p88 = scmp.eq.s32.totalorder %s21, 0
      %p89 = por %p87, %p88
      %p90 = scmp.ne.s32.totalorder %s76, %s77
      %p91 = scmp.eq.s32.totalorder %s22, 3
      %p92 = por %p90, %p91
      %p94 = scmp.ne.s32.totalorder %s77, %s93
      %p95 = scmp.eq.s32.totalorder %s22, 0
      %p96 = por %p94, %p95
      %s98 = sadd.s32 %s97, 1
      %p101 = scmp.eq.s32.totalorder %s16, 3
      %p102 = scmp.ne.s32.totalorder %s97, %s99
      %p103 = scmp.eq.s32.totalorder %s16, 0
      %p104 = por %p102, %p103
      %p105 = scmp.ne.s32.totalorder %s97, %s99
      %p106 = scmp.eq.s32.totalorder %s21, 3
      %p107 = por %p105, %p106
      %p108 = scmp.ne.s32.totalorder %s99, %s100
      %p109 = scmp.eq.s32.totalorder %s21, 0
      %p110 = por %p108, %p109
      %p111 = scmp.ne.s32.totalorder %s99, %s100
      %p112 = scmp.eq.s32.totalorder %s22, 3
      %p113 = por %p111, %p112
      %p115 = scmp.ne.s32.totalorder %s100, %s114
      %p116 = scmp.eq.s32.totalorder %s22, 0
      %p117 = por %p115, %p116
      %p118 = scmp.le.s32.totalorder 1, %s16
      %p119 = scmp.lt.s32.totalorder %s16, 5
      %p120 = pnand %p118, %p119
      %p121 = pneg %p120
      // Predicated region
      $region9: #{sudoku_mlp_forward.1} parent=5 // pred_check
        _
      $region10: #{sudoku_mlp_forward.1} parent=5 // pred_check_branch
        %123 = sbr.rel (%p120) target = $region12
      $region11: #{sudoku_mlp_forward.1} parent=5 // pred_region
        %s124 = ssub.s32 %s16, 1
        // Predicated region
        $region13: #{sudoku_mlp_forward.1} parent=11 // pred_check
          %p125 = pneg %p37
        $region14: #{sudoku_mlp_forward.1} parent=11 // pred_check_branch
          %127 = sbr.rel (%p125) target = $region16
        $region15: #{sudoku_mlp_forward.1} parent=11 // pred_region
          _
        $region16: #{sudoku_mlp_forward.1} parent=11 // pred_fallthru
          _
      $region12: #{sudoku_mlp_forward.1} parent=5 // pred_fallthru
        _
      %p128 = scmp.lt.s32.totalorder %s16, 4
      // Predicated region
      $region17: #{sudoku_mlp_forward.1} parent=5 // pred_check
        %p129 = pneg %p128
      $region18: #{sudoku_mlp_forward.1} parent=5 // pred_check_branch
        %131 = sbr.rel (%p129) target = $region20
      $region19: #{sudoku_mlp_forward.1} parent=5 // pred_region
        // Predicated region
        $region21: #{sudoku_mlp_forward.1} parent=19 // pred_check
          %p132 = pneg %p57
        $region22: #{sudoku_mlp_forward.1} parent=19 // pred_check_branch
          %134 = sbr.rel (%p132) target = $region24
        $region23: #{sudoku_mlp_forward.1} parent=19 // pred_region
          %s135 = sand.u32 %s47, 1
          %s136 = scalar_lea.sflag [#allocation4], %s135
          %s137 = sand.u32 %s47, 1
          %s138 = smul.addr %s137, 2304
          %s139 = scalar_lea.vmem [#allocation3], %s138
          %141 = vsyncadd %s136, 0
          %s142 = smul.addr %s16, 576
          %s143 = smul.addr %s142, 4
          %s144 = scalar_lea.hbm %s1, %s143
          %s145 = sshll.u32 %s144, 4
          %s146 = int_to_ptr.hbm [resolvable:$true] %s145
          %s147 = sshll.u32 %s139, 4
          %s148 = int_to_ptr.vmem [resolvable:$true] %s147
          %153 = dma.hbm_to_vmem [thread:$0]  %s146, 36864, %s148, %s136, 384, 384, 24
        $region24: #{sudoku_mlp_forward.1} parent=19 // pred_fallthru
          _
        // Predicated region
        $region25: #{sudoku_mlp_forward.1} parent=19 // pred_check
          %p154 = pneg %p83
        $region26: #{sudoku_mlp_forward.1} parent=19 // pred_check_branch
          %156 = sbr.rel (%p154) target = $region28
        $region27: #{sudoku_mlp_forward.1} parent=19 // pred_region
          %s157 = sand.u32 %s73, 1
          %s158 = scalar_lea.sflag [#allocation7], %s157
          %s159 = sand.u32 %s73, 1
          %s160 = smul.addr %s159, 6
          %s161 = scalar_lea.vmem [#allocation6], %s160
          %163 = vsyncadd %s158, 0
          %s164 = smul.addr %s16, 6
          %s165 = scalar_lea.hbm %s2, %s164
          %s167 = sshll.u32 %s165, 4
          %s168 = int_to_ptr.hbm [resolvable:$true] %s167
          %s169 = sshll.u32 %s161, 4
          %s170 = int_to_ptr.vmem [resolvable:$true] %s169
          %172 = dma.hbm_to_vmem [thread:$0]  %s168, 96, %s170, %s158
        $region28: #{sudoku_mlp_forward.1} parent=19 // pred_fallthru
          _
      $region20: #{sudoku_mlp_forward.1} parent=5 // pred_fallthru
        _
      %p173 = scmp.le.s32.totalorder 1, %s16
      %p174 = scmp.lt.s32.totalorder %s16, 5
      %p175 = pnand %p173, %p174
      %p176 = pneg %p175
      // Predicated region
      $region29: #{sudoku_mlp_forward.1} parent=5 // pred_check
        _
      $region30: #{sudoku_mlp_forward.1} parent=5 // pred_check_branch
        %178 = sbr.rel (%p175) target = $region32
      $region31: #{sudoku_mlp_forward.1} parent=5 // pred_region
        %s179 = ssub.s32 %s16, 1
        %s180 = sand.u32 %s50, 1
        %s181 = scalar_lea.sflag [#allocation4], %s180
        %s182 = sand.u32 %s50, 1
        %s183 = smul.addr %s182, 2304
        %s184 = scalar_lea.vmem [#allocation3], %s183
        // Predicated region
        $region33: #{sudoku_mlp_forward.1} parent=31 // pred_check
          %p185 = pneg %p63
        $region34: #{sudoku_mlp_forward.1} parent=31 // pred_check_branch
          %187 = sbr.rel (%p185) target = $region36
        $region35: #{sudoku_mlp_forward.1} parent=31 // pred_region
          %189 = dma.done %s181, 36864
        $region36: #{sudoku_mlp_forward.1} parent=31 // pred_fallthru
          _
        %s190 = sand.u32 %s76, 1
        %s191 = scalar_lea.sflag [#allocation7], %s190
        %s192 = sand.u32 %s76, 1
        %s193 = smul.addr %s192, 6
        %s194 = scalar_lea.vmem [#allocation6], %s193
        // Predicated region
        $region37: #{sudoku_mlp_forward.1} parent=31 // pred_check
          %p195 = pneg %p89
        $region38: #{sudoku_mlp_forward.1} parent=31 // pred_check_branch
          %197 = sbr.rel (%p195) target = $region40
        $region39: #{sudoku_mlp_forward.1} parent=31 // pred_region
          %199 = dma.done %s191, 96
        $region40: #{sudoku_mlp_forward.1} parent=31 // pred_fallthru
          _
        %p200 = pneg %p37
        %p201 = pneg %p34
        %s202 = sand.u32 %s50, 1
        %s203 = scalar_lea.sflag [#allocation4], %s202
        %s204 = sand.u32 %s50, 1
        %s205 = smul.addr %s204, 2304
        %s206 = scalar_lea.vmem [#allocation3], %s205
        %p207 = pneg %p63
        %p208 = pneg %p60
        %s209 = sand.u32 %s76, 1
        %s210 = scalar_lea.sflag [#allocation7], %s209
        %s211 = sand.u32 %s76, 1
        %s212 = smul.addr %s211, 6
        %s213 = scalar_lea.vmem [#allocation6], %s212
        %p214 = pneg %p89
        %p215 = pneg %p86
        %p216 = pneg %p110
        %p217 = pneg %p107
        %p218 = scmp.eq.s32.totalorder %s21, 0
        // Predicated region
        $region41: #{sudoku_mlp_forward.1} parent=31 // pred_check
          %p219 = pneg %p218
        $region42: #{sudoku_mlp_forward.1} parent=31 // pred_check_branch
          %221 = sbr.rel (%p219) target = $region44
        $region43: #{sudoku_mlp_forward.1} parent=31 // pred_region
          %v222 = vld [vmem:[%s0] sm:$0xff]
          %v223 = vld [vmem:[%s0 + $0x8] sm:$0xff]
          %v224 = vld [vmem:[%s0 + $0x10] sm:$0xff]
          %v225 = vld [vmem:[%s0 + $0x18] sm:$0xff]
          %v226 = vld [vmem:[%s0 + $0x20] sm:$0xff]
          %v227 = vld [vmem:[%s0 + $0x28] sm:$0xff]
          %228 = vst [vmem:[#allocation2] sm:$0xff] %v222
          %229 = vst [vmem:[#allocation2 + $0x8] sm:$0xff] %v223
          %230 = vst [vmem:[#allocation2 + $0x10] sm:$0xff] %v224
          %231 = vst [vmem:[#allocation2 + $0x18] sm:$0xff] %v225
          %232 = vst [vmem:[#allocation2 + $0x20] sm:$0xff] %v226
          %233 = vst [vmem:[#allocation2 + $0x28] sm:$0xff] %v227
        $region44: #{sudoku_mlp_forward.1} parent=31 // pred_fallthru
          _
        %v234 = vld [vmem:[#allocation2] sm:$0xff]
        %v235 = vld [vmem:[#allocation2 + $0x8] sm:$0xff]
        %v236 = vld [vmem:[#allocation2 + $0x10] sm:$0xff]
        %v237 = vld [vmem:[#allocation2 + $0x18] sm:$0xff]
        %v238 = vld [vmem:[#allocation2 + $0x20] sm:$0xff]
        %v239 = vld [vmem:[#allocation2 + $0x28] sm:$0xff]
        %v240 = vld [vmem:[%s184] sm:$0xff]
        %v241 = vld [vmem:[%s184 + $0x8] sm:$0xff]
        %v242 = vld [vmem:[%s184 + $0x10] sm:$0xff]
        %v243 = vld [vmem:[%s184 + $0x18] sm:$0xff]
        %v244 = vld [vmem:[%s184 + $0x20] sm:$0xff]
        %v245 = vld [vmem:[%s184 + $0x28] sm:$0xff]
        %v246 = vld [vmem:[%s184 + $0x30] sm:$0xff]
        %v247 = vld [vmem:[%s184 + $0x38] sm:$0xff]
        %v248 = vld [vmem:[%s184 + $0x40] sm:$0xff]
        %v249 = vld [vmem:[%s184 + $0x48] sm:$0xff]
        %v250 = vld [vmem:[%s184 + $0x50] sm:$0xff]
        %v251 = vld [vmem:[%s184 + $0x58] sm:$0xff]
        %v252 = vld [vmem:[%s184 + $0x60] sm:$0xff]
        %v253 = vld [vmem:[%s184 + $0x68] sm:$0xff]
        %v254 = vld [vmem:[%s184 + $0x70] sm:$0xff]
        %v255 = vld [vmem:[%s184 + $0x78] sm:$0xff]
        %v256 = vld [vmem:[%s184 + $0x80] sm:$0xff]
        %v257 = vld [vmem:[%s184 + $0x88] sm:$0xff]
        %v258 = vld [vmem:[%s184 + $0x90] sm:$0xff]
        %v259 = vld [vmem:[%s184 + $0x98] sm:$0xff]
        %v260 = vld [vmem:[%s184 + $0xa0] sm:$0xff]
        %v261 = vld [vmem:[%s184 + $0xa8] sm:$0xff]
        %v262 = vld [vmem:[%s184 + $0xb0] sm:$0xff]
        %v263 = vld [vmem:[%s184 + $0xb8] sm:$0xff]
        %v264 = vld [vmem:[%s184 + $0xc0] sm:$0xff]
        %v265 = vld [vmem:[%s184 + $0xc8] sm:$0xff]
        %v266 = vld [vmem:[%s184 + $0xd0] sm:$0xff]
        %v267 = vld [vmem:[%s184 + $0xd8] sm:$0xff]
        %v268 = vld [vmem:[%s184 + $0xe0] sm:$0xff]
        %v269 = vld [vmem:[%s184 + $0xe8] sm:$0xff]
        %v270 = vld [vmem:[%s184 + $0xf0] sm:$0xff]
        %v271 = vld [vmem:[%s184 + $0xf8] sm:$0xff]
        %v272 = vld [vmem:[%s184 + $0x100] sm:$0xff]
        %v273 = vld [vmem:[%s184 + $0x108] sm:$0xff]
        %v274 = vld [vmem:[%s184 + $0x110] sm:$0xff]
        %v275 = vld [vmem:[%s184 + $0x118] sm:$0xff]
        %v276 = vld [vmem:[%s184 + $0x120] sm:$0xff]
        %v277 = vld [vmem:[%s184 + $0x128] sm:$0xff]
        %v278 = vld [vmem:[%s184 + $0x130] sm:$0xff]
        %v279 = vld [vmem:[%s184 + $0x138] sm:$0xff]
        %v280 = vld [vmem:[%s184 + $0x140] sm:$0xff]
        %v281 = vld [vmem:[%s184 + $0x148] sm:$0xff]
        %v282 = vld [vmem:[%s184 + $0x150] sm:$0xff]
        %v283 = vld [vmem:[%s184 + $0x158] sm:$0xff]
        %v284 = vld [vmem:[%s184 + $0x160] sm:$0xff]
        %v285 = vld [vmem:[%s184 + $0x168] sm:$0xff]
        %v286 = vld [vmem:[%s184 + $0x170] sm:$0xff]
        %v287 = vld [vmem:[%s184 + $0x178] sm:$0xff]
        %v288 = vld [vmem:[%s184 + $0x180] sm:$0xff]
        %v289 = vld [vmem:[%s184 + $0x188] sm:$0xff]
        %v290 = vld [vmem:[%s184 + $0x190] sm:$0xff]
        %v291 = vld [vmem:[%s184 + $0x198] sm:$0xff]
        %v292 = vld [vmem:[%s184 + $0x1a0] sm:$0xff]
        %v293 = vld [vmem:[%s184 + $0x1a8] sm:$0xff]
        %v294 = vld [vmem:[%s184 + $0x1b0] sm:$0xff]
        %v295 = vld [vmem:[%s184 + $0x1b8] sm:$0xff]
        %v296 = vld [vmem:[%s184 + $0x1c0] sm:$0xff]
        %v297 = vld [vmem:[%s184 + $0x1c8] sm:$0xff]
        %v298 = vld [vmem:[%s184 + $0x1d0] sm:$0xff]
        %v299 = vld [vmem:[%s184 + $0x1d8] sm:$0xff]
        %v300 = vld [vmem:[%s184 + $0x1e0] sm:$0xff]
        %v301 = vld [vmem:[%s184 + $0x1e8] sm:$0xff]
        %v302 = vld [vmem:[%s184 + $0x1f0] sm:$0xff]
        %v303 = vld [vmem:[%s184 + $0x1f8] sm:$0xff]
        %v304 = vld [vmem:[%s184 + $0x200] sm:$0xff]
        %v305 = vld [vmem:[%s184 + $0x208] sm:$0xff]
        %v306 = vld [vmem:[%s184 + $0x210] sm:$0xff]
        %v307 = vld [vmem:[%s184 + $0x218] sm:$0xff]
        %v308 = vld [vmem:[%s184 + $0x220] sm:$0xff]
        %v309 = vld [vmem:[%s184 + $0x228] sm:$0xff]
        %v310 = vld [vmem:[%s184 + $0x230] sm:$0xff]
        %v311 = vld [vmem:[%s184 + $0x238] sm:$0xff]
        %v312 = vld [vmem:[%s184 + $0x240] sm:$0xff]
        %v313 = vld [vmem:[%s184 + $0x248] sm:$0xff]
        %v314 = vld [vmem:[%s184 + $0x250] sm:$0xff]
        %v315 = vld [vmem:[%s184 + $0x258] sm:$0xff]
        %v316 = vld [vmem:[%s184 + $0x260] sm:$0xff]
        %v317 = vld [vmem:[%s184 + $0x268] sm:$0xff]
        %v318 = vld [vmem:[%s184 + $0x270] sm:$0xff]
        %v319 = vld [vmem:[%s184 + $0x278] sm:$0xff]
        %v320 = vld [vmem:[%s184 + $0x280] sm:$0xff]
        %v321 = vld [vmem:[%s184 + $0x288] sm:$0xff]
        %v322 = vld [vmem:[%s184 + $0x290] sm:$0xff]
        %v323 = vld [vmem:[%s184 + $0x298] sm:$0xff]
        %v324 = vld [vmem:[%s184 + $0x2a0] sm:$0xff]
        %v325 = vld [vmem:[%s184 + $0x2a8] sm:$0xff]
        %v326 = vld [vmem:[%s184 + $0x2b0] sm:$0xff]
        %v327 = vld [vmem:[%s184 + $0x2b8] sm:$0xff]
        %v328 = vld [vmem:[%s184 + $0x2c0] sm:$0xff]
        %v329 = vld [vmem:[%s184 + $0x2c8] sm:$0xff]
        %v330 = vld [vmem:[%s184 + $0x2d0] sm:$0xff]
        %v331 = vld [vmem:[%s184 + $0x2d8] sm:$0xff]
        %v332 = vld [vmem:[%s184 + $0x2e0] sm:$0xff]
        %v333 = vld [vmem:[%s184 + $0x2e8] sm:$0xff]
        %v334 = vld [vmem:[%s184 + $0x2f0] sm:$0xff]
        %v335 = vld [vmem:[%s184 + $0x2f8] sm:$0xff]
        %v336 = vld [vmem:[%s184 + $0x300] sm:$0xff]
        %v337 = vld [vmem:[%s184 + $0x308] sm:$0xff]
        %v338 = vld [vmem:[%s184 + $0x310] sm:$0xff]
        %v339 = vld [vmem:[%s184 + $0x318] sm:$0xff]
        %v340 = vld [vmem:[%s184 + $0x320] sm:$0xff]
        %v341 = vld [vmem:[%s184 + $0x328] sm:$0xff]
        %v342 = vld [vmem:[%s184 + $0x330] sm:$0xff]
        %v343 = vld [vmem:[%s184 + $0x338] sm:$0xff]
        %v344 = vld [vmem:[%s184 + $0x340] sm:$0xff]
        %v345 = vld [vmem:[%s184 + $0x348] sm:$0xff]
        %v346 = vld [vmem:[%s184 + $0x350] sm:$0xff]
        %v347 = vld [vmem:[%s184 + $0x358] sm:$0xff]
        %v348 = vld [vmem:[%s184 + $0x360] sm:$0xff]
        %v349 = vld [vmem:[%s184 + $0x368] sm:$0xff]
        %v350 = vld [vmem:[%s184 + $0x370] sm:$0xff]
        %v351 = vld [vmem:[%s184 + $0x378] sm:$0xff]
        %v352 = vld [vmem:[%s184 + $0x380] sm:$0xff]
        %v353 = vld [vmem:[%s184 + $0x388] sm:$0xff]
        %v354 = vld [vmem:[%s184 + $0x390] sm:$0xff]
        %v355 = vld [vmem:[%s184 + $0x398] sm:$0xff]
        %v356 = vld [vmem:[%s184 + $0x3a0] sm:$0xff]
        %v357 = vld [vmem:[%s184 + $0x3a8] sm:$0xff]
        %v358 = vld [vmem:[%s184 + $0x3b0] sm:$0xff]
        %v359 = vld [vmem:[%s184 + $0x3b8] sm:$0xff]
        %v360 = vld [vmem:[%s184 + $0x3c0] sm:$0xff]
        %v361 = vld [vmem:[%s184 + $0x3c8] sm:$0xff]
        %v362 = vld [vmem:[%s184 + $0x3d0] sm:$0xff]
        %v363 = vld [vmem:[%s184 + $0x3d8] sm:$0xff]
        %v364 = vld [vmem:[%s184 + $0x3e0] sm:$0xff]
        %v365 = vld [vmem:[%s184 + $0x3e8] sm:$0xff]
        %v366 = vld [vmem:[%s184 + $0x3f0] sm:$0xff]
        %v367 = vld [vmem:[%s184 + $0x3f8] sm:$0xff]
        %v368 = vld [vmem:[%s184 + $0x400] sm:$0xff]
        %v369 = vld [vmem:[%s184 + $0x408] sm:$0xff]
        %v370 = vld [vmem:[%s184 + $0x410] sm:$0xff]
        %v371 = vld [vmem:[%s184 + $0x418] sm:$0xff]
        %v372 = vld [vmem:[%s184 + $0x420] sm:$0xff]
        %v373 = vld [vmem:[%s184 + $0x428] sm:$0xff]
        %v374 = vld [vmem:[%s184 + $0x430] sm:$0xff]
        %v375 = vld [vmem:[%s184 + $0x438] sm:$0xff]
        %v376 = vld [vmem:[%s184 + $0x440] sm:$0xff]
        %v377 = vld [vmem:[%s184 + $0x448] sm:$0xff]
        %v378 = vld [vmem:[%s184 + $0x450] sm:$0xff]
        %v379 = vld [vmem:[%s184 + $0x458] sm:$0xff]
        %v380 = vld [vmem:[%s184 + $0x460] sm:$0xff]
        %v381 = vld [vmem:[%s184 + $0x468] sm:$0xff]
        %v382 = vld [vmem:[%s184 + $0x470] sm:$0xff]
        %v383 = vld [vmem:[%s184 + $0x478] sm:$0xff]
        %v384 = vld [vmem:[%s184 + $0x480] sm:$0xff]
        %v385 = vld [vmem:[%s184 + $0x488] sm:$0xff]
        %v386 = vld [vmem:[%s184 + $0x490] sm:$0xff]
        %v387 = vld [vmem:[%s184 + $0x498] sm:$0xff]
        %v388 = vld [vmem:[%s184 + $0x4a0] sm:$0xff]
        %v389 = vld [vmem:[%s184 + $0x4a8] sm:$0xff]
        %v390 = vld [vmem:[%s184 + $0x4b0] sm:$0xff]
        %v391 = vld [vmem:[%s184 + $0x4b8] sm:$0xff]
        %v392 = vld [vmem:[%s184 + $0x4c0] sm:$0xff]
        %v393 = vld [vmem:[%s184 + $0x4c8] sm:$0xff]
        %v394 = vld [vmem:[%s184 + $0x4d0] sm:$0xff]
        %v395 = vld [vmem:[%s184 + $0x4d8] sm:$0xff]
        %v396 = vld [vmem:[%s184 + $0x4e0] sm:$0xff]
        %v397 = vld [vmem:[%s184 + $0x4e8] sm:$0xff]
        %v398 = vld [vmem:[%s184 + $0x4f0] sm:$0xff]
        %v399 = vld [vmem:[%s184 + $0x4f8] sm:$0xff]
        %v400 = vld [vmem:[%s184 + $0x500] sm:$0xff]
        %v401 = vld [vmem:[%s184 + $0x508] sm:$0xff]
        %v402 = vld [vmem:[%s184 + $0x510] sm:$0xff]
        %v403 = vld [vmem:[%s184 + $0x518] sm:$0xff]
        %v404 = vld [vmem:[%s184 + $0x520] sm:$0xff]
        %v405 = vld [vmem:[%s184 + $0x528] sm:$0xff]
        %v406 = vld [vmem:[%s184 + $0x530] sm:$0xff]
        %v407 = vld [vmem:[%s184 + $0x538] sm:$0xff]
        %v408 = vld [vmem:[%s184 + $0x540] sm:$0xff]
        %v409 = vld [vmem:[%s184 + $0x548] sm:$0xff]
        %v410 = vld [vmem:[%s184 + $0x550] sm:$0xff]
        %v411 = vld [vmem:[%s184 + $0x558] sm:$0xff]
        %v412 = vld [vmem:[%s184 + $0x560] sm:$0xff]
        %v413 = vld [vmem:[%s184 + $0x568] sm:$0xff]
        %v414 = vld [vmem:[%s184 + $0x570] sm:$0xff]
        %v415 = vld [vmem:[%s184 + $0x578] sm:$0xff]
        %v416 = vld [vmem:[%s184 + $0x580] sm:$0xff]
        %v417 = vld [vmem:[%s184 + $0x588] sm:$0xff]
        %v418 = vld [vmem:[%s184 + $0x590] sm:$0xff]
        %v419 = vld [vmem:[%s184 + $0x598] sm:$0xff]
        %v420 = vld [vmem:[%s184 + $0x5a0] sm:$0xff]
        %v421 = vld [vmem:[%s184 + $0x5a8] sm:$0xff]
        %v422 = vld [vmem:[%s184 + $0x5b0] sm:$0xff]
        %v423 = vld [vmem:[%s184 + $0x5b8] sm:$0xff]
        %v424 = vld [vmem:[%s184 + $0x5c0] sm:$0xff]
        %v425 = vld [vmem:[%s184 + $0x5c8] sm:$0xff]
        %v426 = vld [vmem:[%s184 + $0x5d0] sm:$0xff]
        %v427 = vld [vmem:[%s184 + $0x5d8] sm:$0xff]
        %v428 = vld [vmem:[%s184 + $0x5e0] sm:$0xff]
        %v429 = vld [vmem:[%s184 + $0x5e8] sm:$0xff]
        %v430 = vld [vmem:[%s184 + $0x5f0] sm:$0xff]
        %v431 = vld [vmem:[%s184 + $0x5f8] sm:$0xff]
        %v432 = vld [vmem:[%s184 + $0x600] sm:$0xff]
        %v433 = vld [vmem:[%s184 + $0x608] sm:$0xff]
        %v434 = vld [vmem:[%s184 + $0x610] sm:$0xff]
        %v435 = vld [vmem:[%s184 + $0x618] sm:$0xff]
        %v436 = vld [vmem:[%s184 + $0x620] sm:$0xff]
        %v437 = vld [vmem:[%s184 + $0x628] sm:$0xff]
        %v438 = vld [vmem:[%s184 + $0x630] sm:$0xff]
        %v439 = vld [vmem:[%s184 + $0x638] sm:$0xff]
        %v440 = vld [vmem:[%s184 + $0x640] sm:$0xff]
        %v441 = vld [vmem:[%s184 + $0x648] sm:$0xff]
        %v442 = vld [vmem:[%s184 + $0x650] sm:$0xff]
        %v443 = vld [vmem:[%s184 + $0x658] sm:$0xff]
        %v444 = vld [vmem:[%s184 + $0x660] sm:$0xff]
        %v445 = vld [vmem:[%s184 + $0x668] sm:$0xff]
        %v446 = vld [vmem:[%s184 + $0x670] sm:$0xff]
        %v447 = vld [vmem:[%s184 + $0x678] sm:$0xff]
        %v448 = vld [vmem:[%s184 + $0x680] sm:$0xff]
        %v449 = vld [vmem:[%s184 + $0x688] sm:$0xff]
        %v450 = vld [vmem:[%s184 + $0x690] sm:$0xff]
        %v451 = vld [vmem:[%s184 + $0x698] sm:$0xff]
        %v452 = vld [vmem:[%s184 + $0x6a0] sm:$0xff]
        %v453 = vld [vmem:[%s184 + $0x6a8] sm:$0xff]
        %v454 = vld [vmem:[%s184 + $0x6b0] sm:$0xff]
        %v455 = vld [vmem:[%s184 + $0x6b8] sm:$0xff]
        %v456 = vld [vmem:[%s184 + $0x6c0] sm:$0xff]
        %v457 = vld [vmem:[%s184 + $0x6c8] sm:$0xff]
        %v458 = vld [vmem:[%s184 + $0x6d0] sm:$0xff]
        %v459 = vld [vmem:[%s184 + $0x6d8] sm:$0xff]
        %v460 = vld [vmem:[%s184 + $0x6e0] sm:$0xff]
        %v461 = vld [vmem:[%s184 + $0x6e8] sm:$0xff]
        %v462 = vld [vmem:[%s184 + $0x6f0] sm:$0xff]
        %v463 = vld [vmem:[%s184 + $0x6f8] sm:$0xff]
        %v464 = vld [vmem:[%s184 + $0x700] sm:$0xff]
        %v465 = vld [vmem:[%s184 + $0x708] sm:$0xff]
        %v466 = vld [vmem:[%s184 + $0x710] sm:$0xff]
        %v467 = vld [vmem:[%s184 + $0x718] sm:$0xff]
        %v468 = vld [vmem:[%s184 + $0x720] sm:$0xff]
        %v469 = vld [vmem:[%s184 + $0x728] sm:$0xff]
        %v470 = vld [vmem:[%s184 + $0x730] sm:$0xff]
        %v471 = vld [vmem:[%s184 + $0x738] sm:$0xff]
        %v472 = vld [vmem:[%s184 + $0x740] sm:$0xff]
        %v473 = vld [vmem:[%s184 + $0x748] sm:$0xff]
        %v474 = vld [vmem:[%s184 + $0x750] sm:$0xff]
        %v475 = vld [vmem:[%s184 + $0x758] sm:$0xff]
        %v476 = vld [vmem:[%s184 + $0x760] sm:$0xff]
        %v477 = vld [vmem:[%s184 + $0x768] sm:$0xff]
        %v478 = vld [vmem:[%s184 + $0x770] sm:$0xff]
        %v479 = vld [vmem:[%s184 + $0x778] sm:$0xff]
        %v480 = vld [vmem:[%s184 + $0x780] sm:$0xff]
        %v481 = vld [vmem:[%s184 + $0x788] sm:$0xff]
        %v482 = vld [vmem:[%s184 + $0x790] sm:$0xff]
        %v483 = vld [vmem:[%s184 + $0x798] sm:$0xff]
        %v484 = vld [vmem:[%s184 + $0x7a0] sm:$0xff]
        %v485 = vld [vmem:[%s184 + $0x7a8] sm:$0xff]
        %v486 = vld [vmem:[%s184 + $0x7b0] sm:$0xff]
        %v487 = vld [vmem:[%s184 + $0x7b8] sm:$0xff]
        %v488 = vld [vmem:[%s184 + $0x7c0] sm:$0xff]
        %v489 = vld [vmem:[%s184 + $0x7c8] sm:$0xff]
        %v490 = vld [vmem:[%s184 + $0x7d0] sm:$0xff]
        %v491 = vld [vmem:[%s184 + $0x7d8] sm:$0xff]
        %v492 = vld [vmem:[%s184 + $0x7e0] sm:$0xff]
        %v493 = vld [vmem:[%s184 + $0x7e8] sm:$0xff]
        %v494 = vld [vmem:[%s184 + $0x7f0] sm:$0xff]
        %v495 = vld [vmem:[%s184 + $0x7f8] sm:$0xff]
        %v496 = vld [vmem:[%s184 + $0x800] sm:$0xff]
        %v497 = vld [vmem:[%s184 + $0x808] sm:$0xff]
        %v498 = vld [vmem:[%s184 + $0x810] sm:$0xff]
        %v499 = vld [vmem:[%s184 + $0x818] sm:$0xff]
        %v500 = vld [vmem:[%s184 + $0x820] sm:$0xff]
        %v501 = vld [vmem:[%s184 + $0x828] sm:$0xff]
        %v502 = vld [vmem:[%s184 + $0x830] sm:$0xff]
        %v503 = vld [vmem:[%s184 + $0x838] sm:$0xff]
        %v504 = vld [vmem:[%s184 + $0x840] sm:$0xff]
        %v505 = vld [vmem:[%s184 + $0x848] sm:$0xff]
        %v506 = vld [vmem:[%s184 + $0x850] sm:$0xff]
        %v507 = vld [vmem:[%s184 + $0x858] sm:$0xff]
        %v508 = vld [vmem:[%s184 + $0x860] sm:$0xff]
        %v509 = vld [vmem:[%s184 + $0x868] sm:$0xff]
        %v510 = vld [vmem:[%s184 + $0x870] sm:$0xff]
        %v511 = vld [vmem:[%s184 + $0x878] sm:$0xff]
        %v512 = vld [vmem:[%s184 + $0x880] sm:$0xff]
        %v513 = vld [vmem:[%s184 + $0x888] sm:$0xff]
        %v514 = vld [vmem:[%s184 + $0x890] sm:$0xff]
        %v515 = vld [vmem:[%s184 + $0x898] sm:$0xff]
        %v516 = vld [vmem:[%s184 + $0x8a0] sm:$0xff]
        %v517 = vld [vmem:[%s184 + $0x8a8] sm:$0xff]
        %v518 = vld [vmem:[%s184 + $0x8b0] sm:$0xff]
        %v519 = vld [vmem:[%s184 + $0x8b8] sm:$0xff]
        %v520 = vld [vmem:[%s184 + $0x8c0] sm:$0xff]
        %v521 = vld [vmem:[%s184 + $0x8c8] sm:$0xff]
        %v522 = vld [vmem:[%s184 + $0x8d0] sm:$0xff]
        %v523 = vld [vmem:[%s184 + $0x8d8] sm:$0xff]
        %v524 = vld [vmem:[%s184 + $0x8e0] sm:$0xff]
        %v525 = vld [vmem:[%s184 + $0x8e8] sm:$0xff]
        %v526 = vld [vmem:[%s184 + $0x8f0] sm:$0xff]
        %v527 = vld [vmem:[%s184 + $0x8f8] sm:$0xff]
        %v528 = vld [vmem:[%s194] sm:$0x3f]
        %v529 = vpack.c.bf16 %v234, %v234
        %v530 = vpack.c.bf16 %v235, %v235
        %v531 = vpack.c.bf16 %v236, %v236
        %v532 = vpack.c.bf16 %v237, %v237
        %v533 = vpack.c.bf16 %v238, %v238
        %v534 = vpack.c.bf16 %v239, %v239
        %v536 = vperm.slane %v528, 0
        %v537 = vperm.slane %v528, 1
        %v538 = vperm.slane %v528, 2
        %v539 = vperm.slane %v528, 3
        %v540 = vperm.slane %v528, 4
        %v541 = vperm.slane %v528, 5
        %v836 = vunpack.c.l.b16 %v240
        %v837 = vunpack.c.h.b16 %v240
        %v838 = vunpack.c.l.b16 %v241
        %v839 = vunpack.c.h.b16 %v241
        %v840 = vunpack.c.l.b16 %v242
        %v841 = vunpack.c.h.b16 %v242
        %v842 = vunpack.c.l.b16 %v243
        %v843 = vunpack.c.h.b16 %v243
        %v844 = vunpack.c.l.b16 %v244
        %v845 = vunpack.c.h.b16 %v244
        %v846 = vunpack.c.l.b16 %v245
        %v847 = vunpack.c.h.b16 %v245
        %v848 = vunpack.c.l.b16 %v246
        %v849 = vunpack.c.h.b16 %v246
        %v850 = vunpack.c.l.b16 %v247
        %v851 = vunpack.c.h.b16 %v247
        %v852 = vunpack.c.l.b16 %v248
        %v853 = vunpack.c.h.b16 %v248
        %v854 = vunpack.c.l.b16 %v249
        %v855 = vunpack.c.h.b16 %v249
        %v856 = vunpack.c.l.b16 %v250
        %v857 = vunpack.c.h.b16 %v250
        %v858 = vunpack.c.l.b16 %v251
        %v859 = vunpack.c.h.b16 %v251
        %v860 = vunpack.c.l.b16 %v252
        %v861 = vunpack.c.h.b16 %v252
        %v862 = vunpack.c.l.b16 %v253
        %v863 = vunpack.c.h.b16 %v253
        %v864 = vunpack.c.l.b16 %v254
        %v865 = vunpack.c.h.b16 %v254
        %v866 = vunpack.c.l.b16 %v255
        %v867 = vunpack.c.h.b16 %v255
        %v868 = vunpack.c.l.b16 %v256
        %v869 = vunpack.c.h.b16 %v256
        %v870 = vunpack.c.l.b16 %v257
        %v871 = vunpack.c.h.b16 %v257
        %v872 = vunpack.c.l.b16 %v258
        %v873 = vunpack.c.h.b16 %v258
        %v874 = vunpack.c.l.b16 %v259
        %v875 = vunpack.c.h.b16 %v259
        %v876 = vunpack.c.l.b16 %v260
        %v877 = vunpack.c.h.b16 %v260
        %v878 = vunpack.c.l.b16 %v261
        %v879 = vunpack.c.h.b16 %v261
        %v880 = vunpack.c.l.b16 %v262
        %v881 = vunpack.c.h.b16 %v262
        %v882 = vunpack.c.l.b16 %v263
        %v883 = vunpack.c.h.b16 %v263
        %v884 = vunpack.c.l.b16 %v264
        %v885 = vunpack.c.h.b16 %v264
        %v886 = vunpack.c.l.b16 %v265
        %v887 = vunpack.c.h.b16 %v265
        %v888 = vunpack.c.l.b16 %v266
        %v889 = vunpack.c.h.b16 %v266
        %v890 = vunpack.c.l.b16 %v267
        %v891 = vunpack.c.h.b16 %v267
        %v892 = vunpack.c.l.b16 %v268
        %v893 = vunpack.c.h.b16 %v268
        %v894 = vunpack.c.l.b16 %v269
        %v895 = vunpack.c.h.b16 %v269
        %v896 = vunpack.c.l.b16 %v270
        %v897 = vunpack.c.h.b16 %v270
        %v898 = vunpack.c.l.b16 %v271
        %v899 = vunpack.c.h.b16 %v271
        %v900 = vunpack.c.l.b16 %v272
        %v901 = vunpack.c.h.b16 %v272
        %v902 = vunpack.c.l.b16 %v273
        %v903 = vunpack.c.h.b16 %v273
        %v904 = vunpack.c.l.b16 %v274
        %v905 = vunpack.c.h.b16 %v274
        %v906 = vunpack.c.l.b16 %v275
        %v907 = vunpack.c.h.b16 %v275
        %v908 = vunpack.c.l.b16 %v276
        %v909 = vunpack.c.h.b16 %v276
        %v910 = vunpack.c.l.b16 %v277
        %v911 = vunpack.c.h.b16 %v277
        %v912 = vunpack.c.l.b16 %v278
        %v913 = vunpack.c.h.b16 %v278
        %v914 = vunpack.c.l.b16 %v279
        %v915 = vunpack.c.h.b16 %v279
        %v916 = vunpack.c.l.b16 %v280
        %v917 = vunpack.c.h.b16 %v280
        %v918 = vunpack.c.l.b16 %v281
        %v919 = vunpack.c.h.b16 %v281
        %v920 = vunpack.c.l.b16 %v282
        %v921 = vunpack.c.h.b16 %v282
        %v922 = vunpack.c.l.b16 %v283
        %v923 = vunpack.c.h.b16 %v283
        %v924 = vunpack.c.l.b16 %v284
        %v925 = vunpack.c.h.b16 %v284
        %v926 = vunpack.c.l.b16 %v285
        %v927 = vunpack.c.h.b16 %v285
        %v928 = vunpack.c.l.b16 %v286
        %v929 = vunpack.c.h.b16 %v286
        %v930 = vunpack.c.l.b16 %v287
        %v931 = vunpack.c.h.b16 %v287
        %v932 = vunpack.c.l.b16 %v288
        %v933 = vunpack.c.h.b16 %v288
        %v934 = vunpack.c.l.b16 %v289
        %v935 = vunpack.c.h.b16 %v289
        %v936 = vunpack.c.l.b16 %v290
        %v937 = vunpack.c.h.b16 %v290
        %v938 = vunpack.c.l.b16 %v291
        %v939 = vunpack.c.h.b16 %v291
        %v940 = vunpack.c.l.b16 %v292
        %v941 = vunpack.c.h.b16 %v292
        %v942 = vunpack.c.l.b16 %v293
        %v943 = vunpack.c.h.b16 %v293
        %v944 = vunpack.c.l.b16 %v294
        %v945 = vunpack.c.h.b16 %v294
        %v946 = vunpack.c.l.b16 %v295
        %v947 = vunpack.c.h.b16 %v295
        %v948 = vunpack.c.l.b16 %v296
        %v949 = vunpack.c.h.b16 %v296
        %v950 = vunpack.c.l.b16 %v297
        %v951 = vunpack.c.h.b16 %v297
        %v952 = vunpack.c.l.b16 %v298
        %v953 = vunpack.c.h.b16 %v298
        %v954 = vunpack.c.l.b16 %v299
        %v955 = vunpack.c.h.b16 %v299
        %v956 = vunpack.c.l.b16 %v300
        %v957 = vunpack.c.h.b16 %v300
        %v958 = vunpack.c.l.b16 %v301
        %v959 = vunpack.c.h.b16 %v301
        %v960 = vunpack.c.l.b16 %v302
        %v961 = vunpack.c.h.b16 %v302
        %v962 = vunpack.c.l.b16 %v303
        %v963 = vunpack.c.h.b16 %v303
        %v964 = vunpack.c.l.b16 %v304
        %v965 = vunpack.c.h.b16 %v304
        %v966 = vunpack.c.l.b16 %v305
        %v967 = vunpack.c.h.b16 %v305
        %v968 = vunpack.c.l.b16 %v306
        %v969 = vunpack.c.h.b16 %v306
        %v970 = vunpack.c.l.b16 %v307
        %v971 = vunpack.c.h.b16 %v307
        %v972 = vunpack.c.l.b16 %v308
        %v973 = vunpack.c.h.b16 %v308
        %v974 = vunpack.c.l.b16 %v309
        %v975 = vunpack.c.h.b16 %v309
        %v976 = vunpack.c.l.b16 %v310
        %v977 = vunpack.c.h.b16 %v310
        %v978 = vunpack.c.l.b16 %v311
        %v979 = vunpack.c.h.b16 %v311
        %v980 = vunpack.c.l.b16 %v312
        %v981 = vunpack.c.h.b16 %v312
        %v982 = vunpack.c.l.b16 %v313
        %v983 = vunpack.c.h.b16 %v313
        %v984 = vunpack.c.l.b16 %v314
        %v985 = vunpack.c.h.b16 %v314
        %v986 = vunpack.c.l.b16 %v315
        %v987 = vunpack.c.h.b16 %v315
        %v988 = vunpack.c.l.b16 %v316
        %v989 = vunpack.c.h.b16 %v316
        %v990 = vunpack.c.l.b16 %v317
        %v991 = vunpack.c.h.b16 %v317
        %v992 = vunpack.c.l.b16 %v318
        %v993 = vunpack.c.h.b16 %v318
        %v994 = vunpack.c.l.b16 %v319
        %v995 = vunpack.c.h.b16 %v319
        %v996 = vunpack.c.l.b16 %v320
        %v997 = vunpack.c.h.b16 %v320
        %v998 = vunpack.c.l.b16 %v321
        %v999 = vunpack.c.h.b16 %v321
        %v1000 = vunpack.c.l.b16 %v322
        %v1001 = vunpack.c.h.b16 %v322
        %v1002 = vunpack.c.l.b16 %v323
        %v1003 = vunpack.c.h.b16 %v323
        %v1004 = vunpack.c.l.b16 %v324
        %v1005 = vunpack.c.h.b16 %v324
        %v1006 = vunpack.c.l.b16 %v325
        %v1007 = vunpack.c.h.b16 %v325
        %v1008 = vunpack.c.l.b16 %v326
        %v1009 = vunpack.c.h.b16 %v326
        %v1010 = vunpack.c.l.b16 %v327
        %v1011 = vunpack.c.h.b16 %v327
        %v1012 = vunpack.c.l.b16 %v328
        %v1013 = vunpack.c.h.b16 %v328
        %v1014 = vunpack.c.l.b16 %v329
        %v1015 = vunpack.c.h.b16 %v329
        %v1016 = vunpack.c.l.b16 %v330
        %v1017 = vunpack.c.h.b16 %v330
        %v1018 = vunpack.c.l.b16 %v331
        %v1019 = vunpack.c.h.b16 %v331
        %v1020 = vunpack.c.l.b16 %v332
        %v1021 = vunpack.c.h.b16 %v332
        %v1022 = vunpack.c.l.b16 %v333
        %v1023 = vunpack.c.h.b16 %v333
        %v1024 = vunpack.c.l.b16 %v334
        %v1025 = vunpack.c.h.b16 %v334
        %v1026 = vunpack.c.l.b16 %v335
        %v1027 = vunpack.c.h.b16 %v335
        %v1028 = vunpack.c.l.b16 %v336
        %v1029 = vunpack.c.h.b16 %v336
        %v1030 = vunpack.c.l.b16 %v337
        %v1031 = vunpack.c.h.b16 %v337
        %v1032 = vunpack.c.l.b16 %v338
        %v1033 = vunpack.c.h.b16 %v338
        %v1034 = vunpack.c.l.b16 %v339
        %v1035 = vunpack.c.h.b16 %v339
        %v1036 = vunpack.c.l.b16 %v340
        %v1037 = vunpack.c.h.b16 %v340
        %v1038 = vunpack.c.l.b16 %v341
        %v1039 = vunpack.c.h.b16 %v341
        %v1040 = vunpack.c.l.b16 %v342
        %v1041 = vunpack.c.h.b16 %v342
        %v1042 = vunpack.c.l.b16 %v343
        %v1043 = vunpack.c.h.b16 %v343
        %v1044 = vunpack.c.l.b16 %v344
        %v1045 = vunpack.c.h.b16 %v344
        %v1046 = vunpack.c.l.b16 %v345
        %v1047 = vunpack.c.h.b16 %v345
        %v1048 = vunpack.c.l.b16 %v346
        %v1049 = vunpack.c.h.b16 %v346
        %v1050 = vunpack.c.l.b16 %v347
        %v1051 = vunpack.c.h.b16 %v347
        %v1052 = vunpack.c.l.b16 %v348
        %v1053 = vunpack.c.h.b16 %v348
        %v1054 = vunpack.c.l.b16 %v349
        %v1055 = vunpack.c.h.b16 %v349
        %v1056 = vunpack.c.l.b16 %v350
        %v1057 = vunpack.c.h.b16 %v350
        %v1058 = vunpack.c.l.b16 %v351
        %v1059 = vunpack.c.h.b16 %v351
        %v1060 = vunpack.c.l.b16 %v352
        %v1061 = vunpack.c.h.b16 %v352
        %v1062 = vunpack.c.l.b16 %v353
        %v1063 = vunpack.c.h.b16 %v353
        %v1064 = vunpack.c.l.b16 %v354
        %v1065 = vunpack.c.h.b16 %v354
        %v1066 = vunpack.c.l.b16 %v355
        %v1067 = vunpack.c.h.b16 %v355
        %v1068 = vunpack.c.l.b16 %v356
        %v1069 = vunpack.c.h.b16 %v356
        %v1070 = vunpack.c.l.b16 %v357
        %v1071 = vunpack.c.h.b16 %v357
        %v1072 = vunpack.c.l.b16 %v358
        %v1073 = vunpack.c.h.b16 %v358
        %v1074 = vunpack.c.l.b16 %v359
        %v1075 = vunpack.c.h.b16 %v359
        %v1076 = vunpack.c.l.b16 %v360
        %v1077 = vunpack.c.h.b16 %v360
        %v1078 = vunpack.c.l.b16 %v361
        %v1079 = vunpack.c.h.b16 %v361
        %v1080 = vunpack.c.l.b16 %v362
        %v1081 = vunpack.c.h.b16 %v362
        %v1082 = vunpack.c.l.b16 %v363
        %v1083 = vunpack.c.h.b16 %v363
        %v1084 = vunpack.c.l.b16 %v364
        %v1085 = vunpack.c.h.b16 %v364
        %v1086 = vunpack.c.l.b16 %v365
        %v1087 = vunpack.c.h.b16 %v365
        %v1088 = vunpack.c.l.b16 %v366
        %v1089 = vunpack.c.h.b16 %v366
        %v1090 = vunpack.c.l.b16 %v367
        %v1091 = vunpack.c.h.b16 %v367
        %v1092 = vunpack.c.l.b16 %v368
        %v1093 = vunpack.c.h.b16 %v368
        %v1094 = vunpack.c.l.b16 %v369
        %v1095 = vunpack.c.h.b16 %v369
        %v1096 = vunpack.c.l.b16 %v370
        %v1097 = vunpack.c.h.b16 %v370
        %v1098 = vunpack.c.l.b16 %v371
        %v1099 = vunpack.c.h.b16 %v371
        %v1100 = vunpack.c.l.b16 %v372
        %v1101 = vunpack.c.h.b16 %v372
        %v1102 = vunpack.c.l.b16 %v373
        %v1103 = vunpack.c.h.b16 %v373
        %v1104 = vunpack.c.l.b16 %v374
        %v1105 = vunpack.c.h.b16 %v374
        %v1106 = vunpack.c.l.b16 %v375
        %v1107 = vunpack.c.h.b16 %v375
        %v1108 = vunpack.c.l.b16 %v376
        %v1109 = vunpack.c.h.b16 %v376
        %v1110 = vunpack.c.l.b16 %v377
        %v1111 = vunpack.c.h.b16 %v377
        %v1112 = vunpack.c.l.b16 %v378
        %v1113 = vunpack.c.h.b16 %v378
        %v1114 = vunpack.c.l.b16 %v379
        %v1115 = vunpack.c.h.b16 %v379
        %v1116 = vunpack.c.l.b16 %v380
        %v1117 = vunpack.c.h.b16 %v380
        %v1118 = vunpack.c.l.b16 %v381
        %v1119 = vunpack.c.h.b16 %v381
        %v1120 = vunpack.c.l.b16 %v382
        %v1121 = vunpack.c.h.b16 %v382
        %v1122 = vunpack.c.l.b16 %v383
        %v1123 = vunpack.c.h.b16 %v383
        %v1124 = vunpack.c.l.b16 %v384
        %v1125 = vunpack.c.h.b16 %v384
        %v1126 = vunpack.c.l.b16 %v385
        %v1127 = vunpack.c.h.b16 %v385
        %v1128 = vunpack.c.l.b16 %v386
        %v1129 = vunpack.c.h.b16 %v386
        %v1130 = vunpack.c.l.b16 %v387
        %v1131 = vunpack.c.h.b16 %v387
        %v1132 = vunpack.c.l.b16 %v388
        %v1133 = vunpack.c.h.b16 %v388
        %v1134 = vunpack.c.l.b16 %v389
        %v1135 = vunpack.c.h.b16 %v389
        %v1136 = vunpack.c.l.b16 %v390
        %v1137 = vunpack.c.h.b16 %v390
        %v1138 = vunpack.c.l.b16 %v391
        %v1139 = vunpack.c.h.b16 %v391
        %v1140 = vunpack.c.l.b16 %v392
        %v1141 = vunpack.c.h.b16 %v392
        %v1142 = vunpack.c.l.b16 %v393
        %v1143 = vunpack.c.h.b16 %v393
        %v1144 = vunpack.c.l.b16 %v394
        %v1145 = vunpack.c.h.b16 %v394
        %v1146 = vunpack.c.l.b16 %v395
        %v1147 = vunpack.c.h.b16 %v395
        %v1148 = vunpack.c.l.b16 %v396
        %v1149 = vunpack.c.h.b16 %v396
        %v1150 = vunpack.c.l.b16 %v397
        %v1151 = vunpack.c.h.b16 %v397
        %v1152 = vunpack.c.l.b16 %v398
        %v1153 = vunpack.c.h.b16 %v398
        %v1154 = vunpack.c.l.b16 %v399
        %v1155 = vunpack.c.h.b16 %v399
        %v1156 = vunpack.c.l.b16 %v400
        %v1157 = vunpack.c.h.b16 %v400
        %v1158 = vunpack.c.l.b16 %v401
        %v1159 = vunpack.c.h.b16 %v401
        %v1160 = vunpack.c.l.b16 %v402
        %v1161 = vunpack.c.h.b16 %v402
        %v1162 = vunpack.c.l.b16 %v403
        %v1163 = vunpack.c.h.b16 %v403
        %v1164 = vunpack.c.l.b16 %v404
        %v1165 = vunpack.c.h.b16 %v404
        %v1166 = vunpack.c.l.b16 %v405
        %v1167 = vunpack.c.h.b16 %v405
        %v1168 = vunpack.c.l.b16 %v406
        %v1169 = vunpack.c.h.b16 %v406
        %v1170 = vunpack.c.l.b16 %v407
        %v1171 = vunpack.c.h.b16 %v407
        %v1172 = vunpack.c.l.b16 %v408
        %v1173 = vunpack.c.h.b16 %v408
        %v1174 = vunpack.c.l.b16 %v409
        %v1175 = vunpack.c.h.b16 %v409
        %v1176 = vunpack.c.l.b16 %v410
        %v1177 = vunpack.c.h.b16 %v410
        %v1178 = vunpack.c.l.b16 %v411
        %v1179 = vunpack.c.h.b16 %v411
        %v1180 = vunpack.c.l.b16 %v412
        %v1181 = vunpack.c.h.b16 %v412
        %v1182 = vunpack.c.l.b16 %v413
        %v1183 = vunpack.c.h.b16 %v413
        %v1184 = vunpack.c.l.b16 %v414
        %v1185 = vunpack.c.h.b16 %v414
        %v1186 = vunpack.c.l.b16 %v415
        %v1187 = vunpack.c.h.b16 %v415
        %v1188 = vunpack.c.l.b16 %v416
        %v1189 = vunpack.c.h.b16 %v416
        %v1190 = vunpack.c.l.b16 %v417
        %v1191 = vunpack.c.h.b16 %v417
        %v1192 = vunpack.c.l.b16 %v418
        %v1193 = vunpack.c.h.b16 %v418
        %v1194 = vunpack.c.l.b16 %v419
        %v1195 = vunpack.c.h.b16 %v419
        %v1196 = vunpack.c.l.b16 %v420
        %v1197 = vunpack.c.h.b16 %v420
        %v1198 = vunpack.c.l.b16 %v421
        %v1199 = vunpack.c.h.b16 %v421
        %v1200 = vunpack.c.l.b16 %v422
        %v1201 = vunpack.c.h.b16 %v422
        %v1202 = vunpack.c.l.b16 %v423
        %v1203 = vunpack.c.h.b16 %v423
        %v1204 = vunpack.c.l.b16 %v424
        %v1205 = vunpack.c.h.b16 %v424
        %v1206 = vunpack.c.l.b16 %v425
        %v1207 = vunpack.c.h.b16 %v425
        %v1208 = vunpack.c.l.b16 %v426
        %v1209 = vunpack.c.h.b16 %v426
        %v1210 = vunpack.c.l.b16 %v427
        %v1211 = vunpack.c.h.b16 %v427
        %v1212 = vunpack.c.l.b16 %v428
        %v1213 = vunpack.c.h.b16 %v428
        %v1214 = vunpack.c.l.b16 %v429
        %v1215 = vunpack.c.h.b16 %v429
        %v1216 = vunpack.c.l.b16 %v430
        %v1217 = vunpack.c.h.b16 %v430
        %v1218 = vunpack.c.l.b16 %v431
        %v1219 = vunpack.c.h.b16 %v431
        %v1220 = vunpack.c.l.b16 %v432
        %v1221 = vunpack.c.h.b16 %v432
        %v1222 = vunpack.c.l.b16 %v433
        %v1223 = vunpack.c.h.b16 %v433
        %v1224 = vunpack.c.l.b16 %v434
        %v1225 = vunpack.c.h.b16 %v434
        %v1226 = vunpack.c.l.b16 %v435
        %v1227 = vunpack.c.h.b16 %v435
        %v1228 = vunpack.c.l.b16 %v436
        %v1229 = vunpack.c.h.b16 %v436
        %v1230 = vunpack.c.l.b16 %v437
        %v1231 = vunpack.c.h.b16 %v437
        %v1232 = vunpack.c.l.b16 %v438
        %v1233 = vunpack.c.h.b16 %v438
        %v1234 = vunpack.c.l.b16 %v439
        %v1235 = vunpack.c.h.b16 %v439
        %v1236 = vunpack.c.l.b16 %v440
        %v1237 = vunpack.c.h.b16 %v440
        %v1238 = vunpack.c.l.b16 %v441
        %v1239 = vunpack.c.h.b16 %v441
        %v1240 = vunpack.c.l.b16 %v442
        %v1241 = vunpack.c.h.b16 %v442
        %v1242 = vunpack.c.l.b16 %v443
        %v1243 = vunpack.c.h.b16 %v443
        %v1244 = vunpack.c.l.b16 %v444
        %v1245 = vunpack.c.h.b16 %v444
        %v1246 = vunpack.c.l.b16 %v445
        %v1247 = vunpack.c.h.b16 %v445
        %v1248 = vunpack.c.l.b16 %v446
        %v1249 = vunpack.c.h.b16 %v446
        %v1250 = vunpack.c.l.b16 %v447
        %v1251 = vunpack.c.h.b16 %v447
        %v1252 = vunpack.c.l.b16 %v448
        %v1253 = vunpack.c.h.b16 %v448
        %v1254 = vunpack.c.l.b16 %v449
        %v1255 = vunpack.c.h.b16 %v449
        %v1256 = vunpack.c.l.b16 %v450
        %v1257 = vunpack.c.h.b16 %v450
        %v1258 = vunpack.c.l.b16 %v451
        %v1259 = vunpack.c.h.b16 %v451
        %v1260 = vunpack.c.l.b16 %v452
        %v1261 = vunpack.c.h.b16 %v452
        %v1262 = vunpack.c.l.b16 %v453
        %v1263 = vunpack.c.h.b16 %v453
        %v1264 = vunpack.c.l.b16 %v454
        %v1265 = vunpack.c.h.b16 %v454
        %v1266 = vunpack.c.l.b16 %v455
        %v1267 = vunpack.c.h.b16 %v455
        %v1268 = vunpack.c.l.b16 %v456
        %v1269 = vunpack.c.h.b16 %v456
        %v1270 = vunpack.c.l.b16 %v457
        %v1271 = vunpack.c.h.b16 %v457
        %v1272 = vunpack.c.l.b16 %v458
        %v1273 = vunpack.c.h.b16 %v458
        %v1274 = vunpack.c.l.b16 %v459
        %v1275 = vunpack.c.h.b16 %v459
        %v1276 = vunpack.c.l.b16 %v460
        %v1277 = vunpack.c.h.b16 %v460
        %v1278 = vunpack.c.l.b16 %v461
        %v1279 = vunpack.c.h.b16 %v461
        %v1280 = vunpack.c.l.b16 %v462
        %v1281 = vunpack.c.h.b16 %v462
        %v1282 = vunpack.c.l.b16 %v463
        %v1283 = vunpack.c.h.b16 %v463
        %v1284 = vunpack.c.l.b16 %v464
        %v1285 = vunpack.c.h.b16 %v464
        %v1286 = vunpack.c.l.b16 %v465
        %v1287 = vunpack.c.h.b16 %v465
        %v1288 = vunpack.c.l.b16 %v466
        %v1289 = vunpack.c.h.b16 %v466
        %v1290 = vunpack.c.l.b16 %v467
        %v1291 = vunpack.c.h.b16 %v467
        %v1292 = vunpack.c.l.b16 %v468
        %v1293 = vunpack.c.h.b16 %v468
        %v1294 = vunpack.c.l.b16 %v469
        %v1295 = vunpack.c.h.b16 %v469
        %v1296 = vunpack.c.l.b16 %v470
        %v1297 = vunpack.c.h.b16 %v470
        %v1298 = vunpack.c.l.b16 %v471
        %v1299 = vunpack.c.h.b16 %v471
        %v1300 = vunpack.c.l.b16 %v472
        %v1301 = vunpack.c.h.b16 %v472
        %v1302 = vunpack.c.l.b16 %v473
        %v1303 = vunpack.c.h.b16 %v473
        %v1304 = vunpack.c.l.b16 %v474
        %v1305 = vunpack.c.h.b16 %v474
        %v1306 = vunpack.c.l.b16 %v475
        %v1307 = vunpack.c.h.b16 %v475
        %v1308 = vunpack.c.l.b16 %v476
        %v1309 = vunpack.c.h.b16 %v476
        %v1310 = vunpack.c.l.b16 %v477
        %v1311 = vunpack.c.h.b16 %v477
        %v1312 = vunpack.c.l.b16 %v478
        %v1313 = vunpack.c.h.b16 %v478
        %v1314 = vunpack.c.l.b16 %v479
        %v1315 = vunpack.c.h.b16 %v479
        %v1316 = vunpack.c.l.b16 %v480
        %v1317 = vunpack.c.h.b16 %v480
        %v1318 = vunpack.c.l.b16 %v481
        %v1319 = vunpack.c.h.b16 %v481
        %v1320 = vunpack.c.l.b16 %v482
        %v1321 = vunpack.c.h.b16 %v482
        %v1322 = vunpack.c.l.b16 %v483
        %v1323 = vunpack.c.h.b16 %v483
        %v1324 = vunpack.c.l.b16 %v484
        %v1325 = vunpack.c.h.b16 %v484
        %v1326 = vunpack.c.l.b16 %v485
        %v1327 = vunpack.c.h.b16 %v485
        %v1328 = vunpack.c.l.b16 %v486
        %v1329 = vunpack.c.h.b16 %v486
        %v1330 = vunpack.c.l.b16 %v487
        %v1331 = vunpack.c.h.b16 %v487
        %v1332 = vunpack.c.l.b16 %v488
        %v1333 = vunpack.c.h.b16 %v488
        %v1334 = vunpack.c.l.b16 %v489
        %v1335 = vunpack.c.h.b16 %v489
        %v1336 = vunpack.c.l.b16 %v490
        %v1337 = vunpack.c.h.b16 %v490
        %v1338 = vunpack.c.l.b16 %v491
        %v1339 = vunpack.c.h.b16 %v491
        %v1340 = vunpack.c.l.b16 %v492
        %v1341 = vunpack.c.h.b16 %v492
        %v1342 = vunpack.c.l.b16 %v493
        %v1343 = vunpack.c.h.b16 %v493
        %v1344 = vunpack.c.l.b16 %v494
        %v1345 = vunpack.c.h.b16 %v494
        %v1346 = vunpack.c.l.b16 %v495
        %v1347 = vunpack.c.h.b16 %v495
        %v1348 = vunpack.c.l.b16 %v496
        %v1349 = vunpack.c.h.b16 %v496
        %v1350 = vunpack.c.l.b16 %v497
        %v1351 = vunpack.c.h.b16 %v497
        %v1352 = vunpack.c.l.b16 %v498
        %v1353 = vunpack.c.h.b16 %v498
        %v1354 = vunpack.c.l.b16 %v499
        %v1355 = vunpack.c.h.b16 %v499
        %v1356 = vunpack.c.l.b16 %v500
        %v1357 = vunpack.c.h.b16 %v500
        %v1358 = vunpack.c.l.b16 %v501
        %v1359 = vunpack.c.h.b16 %v501
        %v1360 = vunpack.c.l.b16 %v502
        %v1361 = vunpack.c.h.b16 %v502
        %v1362 = vunpack.c.l.b16 %v503
        %v1363 = vunpack.c.h.b16 %v503
        %v1364 = vunpack.c.l.b16 %v504
        %v1365 = vunpack.c.h.b16 %v504
        %v1366 = vunpack.c.l.b16 %v505
        %v1367 = vunpack.c.h.b16 %v505
        %v1368 = vunpack.c.l.b16 %v506
        %v1369 = vunpack.c.h.b16 %v506
        %v1370 = vunpack.c.l.b16 %v507
        %v1371 = vunpack.c.h.b16 %v507
        %v1372 = vunpack.c.l.b16 %v508
        %v1373 = vunpack.c.h.b16 %v508
        %v1374 = vunpack.c.l.b16 %v509
        %v1375 = vunpack.c.h.b16 %v509
        %v1376 = vunpack.c.l.b16 %v510
        %v1377 = vunpack.c.h.b16 %v510
        %v1378 = vunpack.c.l.b16 %v511
        %v1379 = vunpack.c.h.b16 %v511
        %v1380 = vunpack.c.l.b16 %v512
        %v1381 = vunpack.c.h.b16 %v512
        %v1382 = vunpack.c.l.b16 %v513
        %v1383 = vunpack.c.h.b16 %v513
        %v1384 = vunpack.c.l.b16 %v514
        %v1385 = vunpack.c.h.b16 %v514
        %v1386 = vunpack.c.l.b16 %v515
        %v1387 = vunpack.c.h.b16 %v515
        %v1388 = vunpack.c.l.b16 %v516
        %v1389 = vunpack.c.h.b16 %v516
        %v1390 = vunpack.c.l.b16 %v517
        %v1391 = vunpack.c.h.b16 %v517
        %v1392 = vunpack.c.l.b16 %v518
        %v1393 = vunpack.c.h.b16 %v518
        %v1394 = vunpack.c.l.b16 %v519
        %v1395 = vunpack.c.h.b16 %v519
        %v1396 = vunpack.c.l.b16 %v520
        %v1397 = vunpack.c.h.b16 %v520
        %v1398 = vunpack.c.l.b16 %v521
        %v1399 = vunpack.c.h.b16 %v521
        %v1400 = vunpack.c.l.b16 %v522
        %v1401 = vunpack.c.h.b16 %v522
        %v1402 = vunpack.c.l.b16 %v523
        %v1403 = vunpack.c.h.b16 %v523
        %v1404 = vunpack.c.l.b16 %v524
        %v1405 = vunpack.c.h.b16 %v524
        %v1406 = vunpack.c.l.b16 %v525
        %v1407 = vunpack.c.h.b16 %v525
        %v1408 = vunpack.c.l.b16 %v526
        %v1409 = vunpack.c.h.b16 %v526
        %v1410 = vunpack.c.l.b16 %v527
        %v1411 = vunpack.c.h.b16 %v527
        %v1412 = vpack.c.b16 %v842, %v836
        %v1413 = vpack.c.b16 %v843, %v837
        %v1414 = vpack.c.b16 %v844, %v838
        %v1415 = vpack.c.b16 %v845, %v839
        %v1416 = vpack.c.b16 %v846, %v840
        %v1417 = vpack.c.b16 %v847, %v841
        %v1418 = vpack.c.b16 %v854, %v848
        %v1419 = vpack.c.b16 %v855, %v849
        %v1420 = vpack.c.b16 %v856, %v850
        %v1421 = vpack.c.b16 %v857, %v851
        %v1422 = vpack.c.b16 %v858, %v852
        %v1423 = vpack.c.b16 %v859, %v853
        %v1424 = vpack.c.b16 %v866, %v860
        %v1425 = vpack.c.b16 %v867, %v861
        %v1426 = vpack.c.b16 %v868, %v862
        %v1427 = vpack.c.b16 %v869, %v863
        %v1428 = vpack.c.b16 %v870, %v864
        %v1429 = vpack.c.b16 %v871, %v865
        %v1430 = vpack.c.b16 %v878, %v872
        %v1431 = vpack.c.b16 %v879, %v873
        %v1432 = vpack.c.b16 %v880, %v874
        %v1433 = vpack.c.b16 %v881, %v875
        %v1434 = vpack.c.b16 %v882, %v876
        %v1435 = vpack.c.b16 %v883, %v877
        %v1436 = vpack.c.b16 %v890, %v884
        %v1437 = vpack.c.b16 %v891, %v885
        %v1438 = vpack.c.b16 %v892, %v886
        %v1439 = vpack.c.b16 %v893, %v887
        %v1440 = vpack.c.b16 %v894, %v888
        %v1441 = vpack.c.b16 %v895, %v889
        %v1442 = vpack.c.b16 %v902, %v896
        %v1443 = vpack.c.b16 %v903, %v897
        %v1444 = vpack.c.b16 %v904, %v898
        %v1445 = vpack.c.b16 %v905, %v899
        %v1446 = vpack.c.b16 %v906, %v900
        %v1447 = vpack.c.b16 %v907, %v901
        %v1448 = vpack.c.b16 %v914, %v908
        %v1449 = vpack.c.b16 %v915, %v909
        %v1450 = vpack.c.b16 %v916, %v910
        %v1451 = vpack.c.b16 %v917, %v911
        %v1452 = vpack.c.b16 %v918, %v912
        %v1453 = vpack.c.b16 %v919, %v913
        %v1454 = vpack.c.b16 %v926, %v920
        %v1455 = vpack.c.b16 %v927, %v921
        %v1456 = vpack.c.b16 %v928, %v922
        %v1457 = vpack.c.b16 %v929, %v923
        %v1458 = vpack.c.b16 %v930, %v924
        %v1459 = vpack.c.b16 %v931, %v925
        %v1460 = vpack.c.b16 %v938, %v932
        %v1461 = vpack.c.b16 %v939, %v933
        %v1462 = vpack.c.b16 %v940, %v934
        %v1463 = vpack.c.b16 %v941, %v935
        %v1464 = vpack.c.b16 %v942, %v936
        %v1465 = vpack.c.b16 %v943, %v937
        %v1466 = vpack.c.b16 %v950, %v944
        %v1467 = vpack.c.b16 %v951, %v945
        %v1468 = vpack.c.b16 %v952, %v946
        %v1469 = vpack.c.b16 %v953, %v947
        %v1470 = vpack.c.b16 %v954, %v948
        %v1471 = vpack.c.b16 %v955, %v949
        %v1472 = vpack.c.b16 %v962, %v956
        %v1473 = vpack.c.b16 %v963, %v957
        %v1474 = vpack.c.b16 %v964, %v958
        %v1475 = vpack.c.b16 %v965, %v959
        %v1476 = vpack.c.b16 %v966, %v960
        %v1477 = vpack.c.b16 %v967, %v961
        %v1478 = vpack.c.b16 %v974, %v968
        %v1479 = vpack.c.b16 %v975, %v969
        %v1480 = vpack.c.b16 %v976, %v970
        %v1481 = vpack.c.b16 %v977, %v971
        %v1482 = vpack.c.b16 %v978, %v972
        %v1483 = vpack.c.b16 %v979, %v973
        %v1484 = vpack.c.b16 %v986, %v980
        %v1485 = vpack.c.b16 %v987, %v981
        %v1486 = vpack.c.b16 %v988, %v982
        %v1487 = vpack.c.b16 %v989, %v983
        %v1488 = vpack.c.b16 %v990, %v984
        %v1489 = vpack.c.b16 %v991, %v985
        %v1490 = vpack.c.b16 %v998, %v992
        %v1491 = vpack.c.b16 %v999, %v993
        %v1492 = vpack.c.b16 %v1000, %v994
        %v1493 = vpack.c.b16 %v1001, %v995
        %v1494 = vpack.c.b16 %v1002, %v996
        %v1495 = vpack.c.b16 %v1003, %v997
        %v1496 = vpack.c.b16 %v1010, %v1004
        %v1497 = vpack.c.b16 %v1011, %v1005
        %v1498 = vpack.c.b16 %v1012, %v1006
        %v1499 = vpack.c.b16 %v1013, %v1007
        %v1500 = vpack.c.b16 %v1014, %v1008
        %v1501 = vpack.c.b16 %v1015, %v1009
        %v1502 = vpack.c.b16 %v1022, %v1016
        %v1503 = vpack.c.b16 %v1023, %v1017
        %v1504 = vpack.c.b16 %v1024, %v1018
        %v1505 = vpack.c.b16 %v1025, %v1019
        %v1506 = vpack.c.b16 %v1026, %v1020
        %v1507 = vpack.c.b16 %v1027, %v1021
        %v1508 = vpack.c.b16 %v1034, %v1028
        %v1509 = vpack.c.b16 %v1035, %v1029
        %v1510 = vpack.c.b16 %v1036, %v1030
        %v1511 = vpack.c.b16 %v1037, %v1031
        %v1512 = vpack.c.b16 %v1038, %v1032
        %v1513 = vpack.c.b16 %v1039, %v1033
        %v1514 = vpack.c.b16 %v1046, %v1040
        %v1515 = vpack.c.b16 %v1047, %v1041
        %v1516 = vpack.c.b16 %v1048, %v1042
        %v1517 = vpack.c.b16 %v1049, %v1043
        %v1518 = vpack.c.b16 %v1050, %v1044
        %v1519 = vpack.c.b16 %v1051, %v1045
        %v1520 = vpack.c.b16 %v1058, %v1052
        %v1521 = vpack.c.b16 %v1059, %v1053
        %v1522 = vpack.c.b16 %v1060, %v1054
        %v1523 = vpack.c.b16 %v1061, %v1055
        %v1524 = vpack.c.b16 %v1062, %v1056
        %v1525 = vpack.c.b16 %v1063, %v1057
        %v1526 = vpack.c.b16 %v1070, %v1064
        %v1527 = vpack.c.b16 %v1071, %v1065
        %v1528 = vpack.c.b16 %v1072, %v1066
        %v1529 = vpack.c.b16 %v1073, %v1067
        %v1530 = vpack.c.b16 %v1074, %v1068
        %v1531 = vpack.c.b16 %v1075, %v1069
        %v1532 = vpack.c.b16 %v1082, %v1076
        %v1533 = vpack.c.b16 %v1083, %v1077
        %v1534 = vpack.c.b16 %v1084, %v1078
        %v1535 = vpack.c.b16 %v1085, %v1079
        %v1536 = vpack.c.b16 %v1086, %v1080
        %v1537 = vpack.c.b16 %v1087, %v1081
        %v1538 = vpack.c.b16 %v1094, %v1088
        %v1539 = vpack.c.b16 %v1095, %v1089
        %v1540 = vpack.c.b16 %v1096, %v1090
        %v1541 = vpack.c.b16 %v1097, %v1091
        %v1542 = vpack.c.b16 %v1098, %v1092
        %v1543 = vpack.c.b16 %v1099, %v1093
        %v1544 = vpack.c.b16 %v1106, %v1100
        %v1545 = vpack.c.b16 %v1107, %v1101
        %v1546 = vpack.c.b16 %v1108, %v1102
        %v1547 = vpack.c.b16 %v1109, %v1103
        %v1548 = vpack.c.b16 %v1110, %v1104
        %v1549 = vpack.c.b16 %v1111, %v1105
        %v1550 = vpack.c.b16 %v1118, %v1112
        %v1551 = vpack.c.b16 %v1119, %v1113
        %v1552 = vpack.c.b16 %v1120, %v1114
        %v1553 = vpack.c.b16 %v1121, %v1115
        %v1554 = vpack.c.b16 %v1122, %v1116
        %v1555 = vpack.c.b16 %v1123, %v1117
        %v1556 = vpack.c.b16 %v1130, %v1124
        %v1557 = vpack.c.b16 %v1131, %v1125
        %v1558 = vpack.c.b16 %v1132, %v1126
        %v1559 = vpack.c.b16 %v1133, %v1127
        %v1560 = vpack.c.b16 %v1134, %v1128
        %v1561 = vpack.c.b16 %v1135, %v1129
        %v1562 = vpack.c.b16 %v1142, %v1136
        %v1563 = vpack.c.b16 %v1143, %v1137
        %v1564 = vpack.c.b16 %v1144, %v1138
        %v1565 = vpack.c.b16 %v1145, %v1139
        %v1566 = vpack.c.b16 %v1146, %v1140
        %v1567 = vpack.c.b16 %v1147, %v1141
        %v1568 = vpack.c.b16 %v1154, %v1148
        %v1569 = vpack.c.b16 %v1155, %v1149
        %v1570 = vpack.c.b16 %v1156, %v1150
        %v1571 = vpack.c.b16 %v1157, %v1151
        %v1572 = vpack.c.b16 %v1158, %v1152
        %v1573 = vpack.c.b16 %v1159, %v1153
        %v1574 = vpack.c.b16 %v1166, %v1160
        %v1575 = vpack.c.b16 %v1167, %v1161
        %v1576 = vpack.c.b16 %v1168, %v1162
        %v1577 = vpack.c.b16 %v1169, %v1163
        %v1578 = vpack.c.b16 %v1170, %v1164
        %v1579 = vpack.c.b16 %v1171, %v1165
        %v1580 = vpack.c.b16 %v1178, %v1172
        %v1581 = vpack.c.b16 %v1179, %v1173
        %v1582 = vpack.c.b16 %v1180, %v1174
        %v1583 = vpack.c.b16 %v1181, %v1175
        %v1584 = vpack.c.b16 %v1182, %v1176
        %v1585 = vpack.c.b16 %v1183, %v1177
        %v1586 = vpack.c.b16 %v1190, %v1184
        %v1587 = vpack.c.b16 %v1191, %v1185
        %v1588 = vpack.c.b16 %v1192, %v1186
        %v1589 = vpack.c.b16 %v1193, %v1187
        %v1590 = vpack.c.b16 %v1194, %v1188
        %v1591 = vpack.c.b16 %v1195, %v1189
        %v1592 = vpack.c.b16 %v1202, %v1196
        %v1593 = vpack.c.b16 %v1203, %v1197
        %v1594 = vpack.c.b16 %v1204, %v1198
        %v1595 = vpack.c.b16 %v1205, %v1199
        %v1596 = vpack.c.b16 %v1206, %v1200
        %v1597 = vpack.c.b16 %v1207, %v1201
        %v1598 = vpack.c.b16 %v1214, %v1208
        %v1599 = vpack.c.b16 %v1215, %v1209
        %v1600 = vpack.c.b16 %v1216, %v1210
        %v1601 = vpack.c.b16 %v1217, %v1211
        %v1602 = vpack.c.b16 %v1218, %v1212
        %v1603 = vpack.c.b16 %v1219, %v1213
        %v1604 = vpack.c.b16 %v1226, %v1220
        %v1605 = vpack.c.b16 %v1227, %v1221
        %v1606 = vpack.c.b16 %v1228, %v1222
        %v1607 = vpack.c.b16 %v1229, %v1223
        %v1608 = vpack.c.b16 %v1230, %v1224
        %v1609 = vpack.c.b16 %v1231, %v1225
        %v1610 = vpack.c.b16 %v1238, %v1232
        %v1611 = vpack.c.b16 %v1239, %v1233
        %v1612 = vpack.c.b16 %v1240, %v1234
        %v1613 = vpack.c.b16 %v1241, %v1235
        %v1614 = vpack.c.b16 %v1242, %v1236
        %v1615 = vpack.c.b16 %v1243, %v1237
        %v1616 = vpack.c.b16 %v1250, %v1244
        %v1617 = vpack.c.b16 %v1251, %v1245
        %v1618 = vpack.c.b16 %v1252, %v1246
        %v1619 = vpack.c.b16 %v1253, %v1247
        %v1620 = vpack.c.b16 %v1254, %v1248
        %v1621 = vpack.c.b16 %v1255, %v1249
        %v1622 = vpack.c.b16 %v1262, %v1256
        %v1623 = vpack.c.b16 %v1263, %v1257
        %v1624 = vpack.c.b16 %v1264, %v1258
        %v1625 = vpack.c.b16 %v1265, %v1259
        %v1626 = vpack.c.b16 %v1266, %v1260
        %v1627 = vpack.c.b16 %v1267, %v1261
        %v1628 = vpack.c.b16 %v1274, %v1268
        %v1629 = vpack.c.b16 %v1275, %v1269
        %v1630 = vpack.c.b16 %v1276, %v1270
        %v1631 = vpack.c.b16 %v1277, %v1271
        %v1632 = vpack.c.b16 %v1278, %v1272
        %v1633 = vpack.c.b16 %v1279, %v1273
        %v1634 = vpack.c.b16 %v1286, %v1280
        %v1635 = vpack.c.b16 %v1287, %v1281
        %v1636 = vpack.c.b16 %v1288, %v1282
        %v1637 = vpack.c.b16 %v1289, %v1283
        %v1638 = vpack.c.b16 %v1290, %v1284
        %v1639 = vpack.c.b16 %v1291, %v1285
        %v1640 = vpack.c.b16 %v1298, %v1292
        %v1641 = vpack.c.b16 %v1299, %v1293
        %v1642 = vpack.c.b16 %v1300, %v1294
        %v1643 = vpack.c.b16 %v1301, %v1295
        %v1644 = vpack.c.b16 %v1302, %v1296
        %v1645 = vpack.c.b16 %v1303, %v1297
        %v1646 = vpack.c.b16 %v1310, %v1304
        %v1647 = vpack.c.b16 %v1311, %v1305
        %v1648 = vpack.c.b16 %v1312, %v1306
        %v1649 = vpack.c.b16 %v1313, %v1307
        %v1650 = vpack.c.b16 %v1314, %v1308
        %v1651 = vpack.c.b16 %v1315, %v1309
        %v1652 = vpack.c.b16 %v1322, %v1316
        %v1653 = vpack.c.b16 %v1323, %v1317
        %v1654 = vpack.c.b16 %v1324, %v1318
        %v1655 = vpack.c.b16 %v1325, %v1319
        %v1656 = vpack.c.b16 %v1326, %v1320
        %v1657 = vpack.c.b16 %v1327, %v1321
        %v1658 = vpack.c.b16 %v1334, %v1328
        %v1659 = vpack.c.b16 %v1335, %v1329
        %v1660 = vpack.c.b16 %v1336, %v1330
        %v1661 = vpack.c.b16 %v1337, %v1331
        %v1662 = vpack.c.b16 %v1338, %v1332
        %v1663 = vpack.c.b16 %v1339, %v1333
        %v1664 = vpack.c.b16 %v1346, %v1340
        %v1665 = vpack.c.b16 %v1347, %v1341
        %v1666 = vpack.c.b16 %v1348, %v1342
        %v1667 = vpack.c.b16 %v1349, %v1343
        %v1668 = vpack.c.b16 %v1350, %v1344
        %v1669 = vpack.c.b16 %v1351, %v1345
        %v1670 = vpack.c.b16 %v1358, %v1352
        %v1671 = vpack.c.b16 %v1359, %v1353
        %v1672 = vpack.c.b16 %v1360, %v1354
        %v1673 = vpack.c.b16 %v1361, %v1355
        %v1674 = vpack.c.b16 %v1362, %v1356
        %v1675 = vpack.c.b16 %v1363, %v1357
        %v1676 = vpack.c.b16 %v1370, %v1364
        %v1677 = vpack.c.b16 %v1371, %v1365
        %v1678 = vpack.c.b16 %v1372, %v1366
        %v1679 = vpack.c.b16 %v1373, %v1367
        %v1680 = vpack.c.b16 %v1374, %v1368
        %v1681 = vpack.c.b16 %v1375, %v1369
        %v1682 = vpack.c.b16 %v1382, %v1376
        %v1683 = vpack.c.b16 %v1383, %v1377
        %v1684 = vpack.c.b16 %v1384, %v1378
        %v1685 = vpack.c.b16 %v1385, %v1379
        %v1686 = vpack.c.b16 %v1386, %v1380
        %v1687 = vpack.c.b16 %v1387, %v1381
        %v1688 = vpack.c.b16 %v1394, %v1388
        %v1689 = vpack.c.b16 %v1395, %v1389
        %v1690 = vpack.c.b16 %v1396, %v1390
        %v1691 = vpack.c.b16 %v1397, %v1391
        %v1692 = vpack.c.b16 %v1398, %v1392
        %v1693 = vpack.c.b16 %v1399, %v1393
        %v1694 = vpack.c.b16 %v1406, %v1400
        %v1695 = vpack.c.b16 %v1407, %v1401
        %v1696 = vpack.c.b16 %v1408, %v1402
        %v1697 = vpack.c.b16 %v1409, %v1403
        %v1698 = vpack.c.b16 %v1410, %v1404
        %v1699 = vpack.c.b16 %v1411, %v1405
        %1988 = vmatpush.bf16.msra.mxu0 %v1454
        %1989 = vmatpush.bf16.msra.mxu0 %v1448
        %1990 = vmatpush.bf16.msra.mxu0 %v1442
        %1991 = vmatpush.bf16.msra.mxu0 %v1436
        %1992 = vmatpush.bf16.msra.mxu0 %v1430
        %1993 = vmatpush.bf16.msra.mxu0 %v1424
        %1994 = vmatpush.bf16.msra.mxu0 %v1418
        %1995 = vmatpush.bf16.msra.mxu0 %v1412
        %1996 = vmatmul.bf16.gmra.mxu0 %v529
        %v1997 = vpop.f32.mrf.mxu0
        %v1998 = vadd.f32 %v536, %v1997
        %v1999 = vpop.f32.mrf.mxu0
        %2000 = vdwg.mxu0
        %2001 = vmatpush.bf16.msra.mxu0 %v1502
        %2002 = vmatpush.bf16.msra.mxu0 %v1496
        %2003 = vmatpush.bf16.msra.mxu0 %v1490
        %2004 = vmatpush.bf16.msra.mxu0 %v1484
        %2005 = vmatpush.bf16.msra.mxu0 %v1478
        %2006 = vmatpush.bf16.msra.mxu0 %v1472
        %2007 = vmatpush.bf16.msra.mxu0 %v1466
        %2008 = vmatpush.bf16.msra.mxu0 %v1460
        %2009 = vmatmul.bf16.gmra.mxu0 %v530
        %v2010 = vpop.f32.mrf.mxu0
        %v2011 = vadd.f32 %v1998, %v2010
        %v2012 = vpop.f32.mrf.mxu0
        %2013 = vdwg.mxu0
        %2014 = vmatpush.bf16.msra.mxu0 %v1550
        %2015 = vmatpush.bf16.msra.mxu0 %v1544
        %2016 = vmatpush.bf16.msra.mxu0 %v1538
        %2017 = vmatpush.bf16.msra.mxu0 %v1532
        %2018 = vmatpush.bf16.msra.mxu0 %v1526
        %2019 = vmatpush.bf16.msra.mxu0 %v1520
        %2020 = vmatpush.bf16.msra.mxu0 %v1514
        %2021 = vmatpush.bf16.msra.mxu0 %v1508
        %2022 = vmatmul.bf16.gmra.mxu0 %v531
        %v2023 = vpop.f32.mrf.mxu0
        %v2024 = vadd.f32 %v2011, %v2023
        %v2025 = vpop.f32.mrf.mxu0
        %2026 = vdwg.mxu0
        %2027 = vmatpush.bf16.msra.mxu0 %v1598
        %2028 = vmatpush.bf16.msra.mxu0 %v1592
        %2029 = vmatpush.bf16.msra.mxu0 %v1586
        %2030 = vmatpush.bf16.msra.mxu0 %v1580
        %2031 = vmatpush.bf16.msra.mxu0 %v1574
        %2032 = vmatpush.bf16.msra.mxu0 %v1568
        %2033 = vmatpush.bf16.msra.mxu0 %v1562
        %2034 = vmatpush.bf16.msra.mxu0 %v1556
        %2035 = vmatmul.bf16.gmra.mxu0 %v532
        %v2036 = vpop.f32.mrf.mxu0
        %v2037 = vadd.f32 %v2024, %v2036
        %v2038 = vpop.f32.mrf.mxu0
        %2039 = vdwg.mxu0
        %2040 = vmatpush.bf16.msra.mxu0 %v1646
        %2041 = vmatpush.bf16.msra.mxu0 %v1640
        %2042 = vmatpush.bf16.msra.mxu0 %v1634
        %2043 = vmatpush.bf16.msra.mxu0 %v1628
        %2044 = vmatpush.bf16.msra.mxu0 %v1622
        %2045 = vmatpush.bf16.msra.mxu0 %v1616
        %2046 = vmatpush.bf16.msra.mxu0 %v1610
        %2047 = vmatpush.bf16.msra.mxu0 %v1604
        %2048 = vmatmul.bf16.gmra.mxu0 %v533
        %v2049 = vpop.f32.mrf.mxu0
        %v2050 = vadd.f32 %v2037, %v2049
        %v2051 = vpop.f32.mrf.mxu0
        %2052 = vdwg.mxu0
        %2053 = vmatpush.bf16.msra.mxu0 %v1694
        %2054 = vmatpush.bf16.msra.mxu0 %v1688
        %2055 = vmatpush.bf16.msra.mxu0 %v1682
        %2056 = vmatpush.bf16.msra.mxu0 %v1676
        %2057 = vmatpush.bf16.msra.mxu0 %v1670
        %2058 = vmatpush.bf16.msra.mxu0 %v1664
        %2059 = vmatpush.bf16.msra.mxu0 %v1658
        %2060 = vmatpush.bf16.msra.mxu0 %v1652
        %2061 = vmatmul.bf16.gmra.mxu0 %v534
        %v2062 = vpop.f32.mrf.mxu0
        %v2063 = vadd.f32 %v2050, %v2062
        %v2064 = vpop.f32.mrf.mxu0
        %2065 = vdwg.mxu0
        %2066 = vmatpush.bf16.msra.mxu0 %v1455
        %2067 = vmatpush.bf16.msra.mxu0 %v1449
        %2068 = vmatpush.bf16.msra.mxu0 %v1443
        %2069 = vmatpush.bf16.msra.mxu0 %v1437
        %2070 = vmatpush.bf16.msra.mxu0 %v1431
        %2071 = vmatpush.bf16.msra.mxu0 %v1425
        %2072 = vmatpush.bf16.msra.mxu0 %v1419
        %2073 = vmatpush.bf16.msra.mxu0 %v1413
        %2074 = vmatmul.bf16.gmra.mxu0 %v529
        %v2075 = vpop.f32.mrf.mxu0
        %v2076 = vadd.f32 %v537, %v2075
        %v2077 = vpop.f32.mrf.mxu0
        %2078 = vdwg.mxu0
        %2079 = vmatpush.bf16.msra.mxu0 %v1503
        %2080 = vmatpush.bf16.msra.mxu0 %v1497
        %2081 = vmatpush.bf16.msra.mxu0 %v1491
        %2082 = vmatpush.bf16.msra.mxu0 %v1485
        %2083 = vmatpush.bf16.msra.mxu0 %v1479
        %2084 = vmatpush.bf16.msra.mxu0 %v1473
        %2085 = vmatpush.bf16.msra.mxu0 %v1467
        %2086 = vmatpush.bf16.msra.mxu0 %v1461
        %2087 = vmatmul.bf16.gmra.mxu0 %v530
        %v2088 = vpop.f32.mrf.mxu0
        %v2089 = vadd.f32 %v2076, %v2088
        %v2090 = vpop.f32.mrf.mxu0
        %2091 = vdwg.mxu0
        %2092 = vmatpush.bf16.msra.mxu0 %v1551
        %2093 = vmatpush.bf16.msra.mxu0 %v1545
        %2094 = vmatpush.bf16.msra.mxu0 %v1539
        %2095 = vmatpush.bf16.msra.mxu0 %v1533
        %2096 = vmatpush.bf16.msra.mxu0 %v1527
        %2097 = vmatpush.bf16.msra.mxu0 %v1521
        %2098 = vmatpush.bf16.msra.mxu0 %v1515
        %2099 = vmatpush.bf16.msra.mxu0 %v1509
        %2100 = vmatmul.bf16.gmra.mxu0 %v531
        %v2101 = vpop.f32.mrf.mxu0
        %v2102 = vadd.f32 %v2089, %v2101
        %v2103 = vpop.f32.mrf.mxu0
        %2104 = vdwg.mxu0
        %2105 = vmatpush.bf16.msra.mxu0 %v1599
        %2106 = vmatpush.bf16.msra.mxu0 %v1593
        %2107 = vmatpush.bf16.msra.mxu0 %v1587
        %2108 = vmatpush.bf16.msra.mxu0 %v1581
        %2109 = vmatpush.bf16.msra.mxu0 %v1575
        %2110 = vmatpush.bf16.msra.mxu0 %v1569
        %2111 = vmatpush.bf16.msra.mxu0 %v1563
        %2112 = vmatpush.bf16.msra.mxu0 %v1557
        %2113 = vmatmul.bf16.gmra.mxu0 %v532
        %v2114 = vpop.f32.mrf.mxu0
        %v2115 = vadd.f32 %v2102, %v2114
        %v2116 = vpop.f32.mrf.mxu0
        %2117 = vdwg.mxu0
        %2118 = vmatpush.bf16.msra.mxu0 %v1647
        %2119 = vmatpush.bf16.msra.mxu0 %v1641
        %2120 = vmatpush.bf16.msra.mxu0 %v1635
        %2121 = vmatpush.bf16.msra.mxu0 %v1629
        %2122 = vmatpush.bf16.msra.mxu0 %v1623
        %2123 = vmatpush.bf16.msra.mxu0 %v1617
        %2124 = vmatpush.bf16.msra.mxu0 %v1611
        %2125 = vmatpush.bf16.msra.mxu0 %v1605
        %2126 = vmatmul.bf16.gmra.mxu0 %v533
        %v2127 = vpop.f32.mrf.mxu0
        %v2128 = vadd.f32 %v2115, %v2127
        %v2129 = vpop.f32.mrf.mxu0
        %2130 = vdwg.mxu0
        %2131 = vmatpush.bf16.msra.mxu0 %v1695
        %2132 = vmatpush.bf16.msra.mxu0 %v1689
        %2133 = vmatpush.bf16.msra.mxu0 %v1683
        %2134 = vmatpush.bf16.msra.mxu0 %v1677
        %2135 = vmatpush.bf16.msra.mxu0 %v1671
        %2136 = vmatpush.bf16.msra.mxu0 %v1665
        %2137 = vmatpush.bf16.msra.mxu0 %v1659
        %2138 = vmatpush.bf16.msra.mxu0 %v1653
        %2139 = vmatmul.bf16.gmra.mxu0 %v534
        %v2140 = vpop.f32.mrf.mxu0
        %v2141 = vadd.f32 %v2128, %v2140
        %v2142 = vpop.f32.mrf.mxu0
        %2143 = vdwg.mxu0
        %2144 = vmatpush.bf16.msra.mxu0 %v1456
        %2145 = vmatpush.bf16.msra.mxu0 %v1450
        %2146 = vmatpush.bf16.msra.mxu0 %v1444
        %2147 = vmatpush.bf16.msra.mxu0 %v1438
        %2148 = vmatpush.bf16.msra.mxu0 %v1432
        %2149 = vmatpush.bf16.msra.mxu0 %v1426
        %2150 = vmatpush.bf16.msra.mxu0 %v1420
        %2151 = vmatpush.bf16.msra.mxu0 %v1414
        %2152 = vmatmul.bf16.gmra.mxu0 %v529
        %v2153 = vpop.f32.mrf.mxu0
        %v2154 = vadd.f32 %v538, %v2153
        %v2155 = vpop.f32.mrf.mxu0
        %2156 = vdwg.mxu0
        %2157 = vmatpush.bf16.msra.mxu0 %v1504
        %2158 = vmatpush.bf16.msra.mxu0 %v1498
        %2159 = vmatpush.bf16.msra.mxu0 %v1492
        %2160 = vmatpush.bf16.msra.mxu0 %v1486
        %2161 = vmatpush.bf16.msra.mxu0 %v1480
        %2162 = vmatpush.bf16.msra.mxu0 %v1474
        %2163 = vmatpush.bf16.msra.mxu0 %v1468
        %2164 = vmatpush.bf16.msra.mxu0 %v1462
        %2165 = vmatmul.bf16.gmra.mxu0 %v530
        %v2166 = vpop.f32.mrf.mxu0
        %v2167 = vadd.f32 %v2154, %v2166
        %v2168 = vpop.f32.mrf.mxu0
        %2169 = vdwg.mxu0
        %2170 = vmatpush.bf16.msra.mxu0 %v1552
        %2171 = vmatpush.bf16.msra.mxu0 %v1546
        %2172 = vmatpush.bf16.msra.mxu0 %v1540
        %2173 = vmatpush.bf16.msra.mxu0 %v1534
        %2174 = vmatpush.bf16.msra.mxu0 %v1528
        %2175 = vmatpush.bf16.msra.mxu0 %v1522
        %2176 = vmatpush.bf16.msra.mxu0 %v1516
        %2177 = vmatpush.bf16.msra.mxu0 %v1510
        %2178 = vmatmul.bf16.gmra.mxu0 %v531
        %v2179 = vpop.f32.mrf.mxu0
        %v2180 = vadd.f32 %v2167, %v2179
        %v2181 = vpop.f32.mrf.mxu0
        %2182 = vdwg.mxu0
        %2183 = vmatpush.bf16.msra.mxu0 %v1600
        %2184 = vmatpush.bf16.msra.mxu0 %v1594
        %2185 = vmatpush.bf16.msra.mxu0 %v1588
        %2186 = vmatpush.bf16.msra.mxu0 %v1582
        %2187 = vmatpush.bf16.msra.mxu0 %v1576
        %2188 = vmatpush.bf16.msra.mxu0 %v1570
        %2189 = vmatpush.bf16.msra.mxu0 %v1564
        %2190 = vmatpush.bf16.msra.mxu0 %v1558
        %2191 = vmatmul.bf16.gmra.mxu0 %v532
        %v2192 = vpop.f32.mrf.mxu0
        %v2193 = vadd.f32 %v2180, %v2192
        %v2194 = vpop.f32.mrf.mxu0
        %2195 = vdwg.mxu0
        %2196 = vmatpush.bf16.msra.mxu0 %v1648
        %2197 = vmatpush.bf16.msra.mxu0 %v1642
        %2198 = vmatpush.bf16.msra.mxu0 %v1636
        %2199 = vmatpush.bf16.msra.mxu0 %v1630
        %2200 = vmatpush.bf16.msra.mxu0 %v1624
        %2201 = vmatpush.bf16.msra.mxu0 %v1618
        %2202 = vmatpush.bf16.msra.mxu0 %v1612
        %2203 = vmatpush.bf16.msra.mxu0 %v1606
        %2204 = vmatmul.bf16.gmra.mxu0 %v533
        %v2205 = vpop.f32.mrf.mxu0
        %v2206 = vadd.f32 %v2193, %v2205
        %v2207 = vpop.f32.mrf.mxu0
        %2208 = vdwg.mxu0
        %2209 = vmatpush.bf16.msra.mxu0 %v1696
        %2210 = vmatpush.bf16.msra.mxu0 %v1690
        %2211 = vmatpush.bf16.msra.mxu0 %v1684
        %2212 = vmatpush.bf16.msra.mxu0 %v1678
        %2213 = vmatpush.bf16.msra.mxu0 %v1672
        %2214 = vmatpush.bf16.msra.mxu0 %v1666
        %2215 = vmatpush.bf16.msra.mxu0 %v1660
        %2216 = vmatpush.bf16.msra.mxu0 %v1654
        %2217 = vmatmul.bf16.gmra.mxu0 %v534
        %v2218 = vpop.f32.mrf.mxu0
        %v2219 = vadd.f32 %v2206, %v2218
        %v2220 = vpop.f32.mrf.mxu0
        %2221 = vdwg.mxu0
        %2222 = vmatpush.bf16.msra.mxu0 %v1457
        %2223 = vmatpush.bf16.msra.mxu0 %v1451
        %2224 = vmatpush.bf16.msra.mxu0 %v1445
        %2225 = vmatpush.bf16.msra.mxu0 %v1439
        %2226 = vmatpush.bf16.msra.mxu0 %v1433
        %2227 = vmatpush.bf16.msra.mxu0 %v1427
        %2228 = vmatpush.bf16.msra.mxu0 %v1421
        %2229 = vmatpush.bf16.msra.mxu0 %v1415
        %2230 = vmatmul.bf16.gmra.mxu0 %v529
        %v2231 = vpop.f32.mrf.mxu0
        %v2232 = vadd.f32 %v539, %v2231
        %v2233 = vpop.f32.mrf.mxu0
        %2234 = vdwg.mxu0
        %2235 = vmatpush.bf16.msra.mxu0 %v1505
        %2236 = vmatpush.bf16.msra.mxu0 %v1499
        %2237 = vmatpush.bf16.msra.mxu0 %v1493
        %2238 = vmatpush.bf16.msra.mxu0 %v1487
        %2239 = vmatpush.bf16.msra.mxu0 %v1481
        %2240 = vmatpush.bf16.msra.mxu0 %v1475
        %2241 = vmatpush.bf16.msra.mxu0 %v1469
        %2242 = vmatpush.bf16.msra.mxu0 %v1463
        %2243 = vmatmul.bf16.gmra.mxu0 %v530
        %v2244 = vpop.f32.mrf.mxu0
        %v2245 = vadd.f32 %v2232, %v2244
        %v2246 = vpop.f32.mrf.mxu0
        %2247 = vdwg.mxu0
        %2248 = vmatpush.bf16.msra.mxu0 %v1553
        %2249 = vmatpush.bf16.msra.mxu0 %v1547
        %2250 = vmatpush.bf16.msra.mxu0 %v1541
        %2251 = vmatpush.bf16.msra.mxu0 %v1535
        %2252 = vmatpush.bf16.msra.mxu0 %v1529
        %2253 = vmatpush.bf16.msra.mxu0 %v1523
        %2254 = vmatpush.bf16.msra.mxu0 %v1517
        %2255 = vmatpush.bf16.msra.mxu0 %v1511
        %2256 = vmatmul.bf16.gmra.mxu0 %v531
        %v2257 = vpop.f32.mrf.mxu0
        %v2258 = vadd.f32 %v2245, %v2257
        %v2259 = vpop.f32.mrf.mxu0
        %2260 = vdwg.mxu0
        %2261 = vmatpush.bf16.msra.mxu0 %v1601
        %2262 = vmatpush.bf16.msra.mxu0 %v1595
        %2263 = vmatpush.bf16.msra.mxu0 %v1589
        %2264 = vmatpush.bf16.msra.mxu0 %v1583
        %2265 = vmatpush.bf16.msra.mxu0 %v1577
        %2266 = vmatpush.bf16.msra.mxu0 %v1571
        %2267 = vmatpush.bf16.msra.mxu0 %v1565
        %2268 = vmatpush.bf16.msra.mxu0 %v1559
        %2269 = vmatmul.bf16.gmra.mxu0 %v532
        %v2270 = vpop.f32.mrf.mxu0
        %v2271 = vadd.f32 %v2258, %v2270
        %v2272 = vpop.f32.mrf.mxu0
        %2273 = vdwg.mxu0
        %2274 = vmatpush.bf16.msra.mxu0 %v1649
        %2275 = vmatpush.bf16.msra.mxu0 %v1643
        %2276 = vmatpush.bf16.msra.mxu0 %v1637
        %2277 = vmatpush.bf16.msra.mxu0 %v1631
        %2278 = vmatpush.bf16.msra.mxu0 %v1625
        %2279 = vmatpush.bf16.msra.mxu0 %v1619
        %2280 = vmatpush.bf16.msra.mxu0 %v1613
        %2281 = vmatpush.bf16.msra.mxu0 %v1607
        %2282 = vmatmul.bf16.gmra.mxu0 %v533
        %v2283 = vpop.f32.mrf.mxu0
        %v2284 = vadd.f32 %v2271, %v2283
        %v2285 = vpop.f32.mrf.mxu0
        %2286 = vdwg.mxu0
        %2287 = vmatpush.bf16.msra.mxu0 %v1697
        %2288 = vmatpush.bf16.msra.mxu0 %v1691
        %2289 = vmatpush.bf16.msra.mxu0 %v1685
        %2290 = vmatpush.bf16.msra.mxu0 %v1679
        %2291 = vmatpush.bf16.msra.mxu0 %v1673
        %2292 = vmatpush.bf16.msra.mxu0 %v1667
        %2293 = vmatpush.bf16.msra.mxu0 %v1661
        %2294 = vmatpush.bf16.msra.mxu0 %v1655
        %2295 = vmatmul.bf16.gmra.mxu0 %v534
        %v2296 = vpop.f32.mrf.mxu0
        %v2297 = vadd.f32 %v2284, %v2296
        %v2298 = vpop.f32.mrf.mxu0
        %2299 = vdwg.mxu0
        %2300 = vmatpush.bf16.msra.mxu0 %v1458
        %2301 = vmatpush.bf16.msra.mxu0 %v1452
        %2302 = vmatpush.bf16.msra.mxu0 %v1446
        %2303 = vmatpush.bf16.msra.mxu0 %v1440
        %2304 = vmatpush.bf16.msra.mxu0 %v1434
        %2305 = vmatpush.bf16.msra.mxu0 %v1428
        %2306 = vmatpush.bf16.msra.mxu0 %v1422
        %2307 = vmatpush.bf16.msra.mxu0 %v1416
        %2308 = vmatmul.bf16.gmra.mxu0 %v529
        %v2309 = vpop.f32.mrf.mxu0
        %v2310 = vadd.f32 %v540, %v2309
        %v2311 = vpop.f32.mrf.mxu0
        %2312 = vdwg.mxu0
        %2313 = vmatpush.bf16.msra.mxu0 %v1506
        %2314 = vmatpush.bf16.msra.mxu0 %v1500
        %2315 = vmatpush.bf16.msra.mxu0 %v1494
        %2316 = vmatpush.bf16.msra.mxu0 %v1488
        %2317 = vmatpush.bf16.msra.mxu0 %v1482
        %2318 = vmatpush.bf16.msra.mxu0 %v1476
        %2319 = vmatpush.bf16.msra.mxu0 %v1470
        %2320 = vmatpush.bf16.msra.mxu0 %v1464
        %2321 = vmatmul.bf16.gmra.mxu0 %v530
        %v2322 = vpop.f32.mrf.mxu0
        %v2323 = vadd.f32 %v2310, %v2322
        %v2324 = vpop.f32.mrf.mxu0
        %2325 = vdwg.mxu0
        %2326 = vmatpush.bf16.msra.mxu0 %v1554
        %2327 = vmatpush.bf16.msra.mxu0 %v1548
        %2328 = vmatpush.bf16.msra.mxu0 %v1542
        %2329 = vmatpush.bf16.msra.mxu0 %v1536
        %2330 = vmatpush.bf16.msra.mxu0 %v1530
        %2331 = vmatpush.bf16.msra.mxu0 %v1524
        %2332 = vmatpush.bf16.msra.mxu0 %v1518
        %2333 = vmatpush.bf16.msra.mxu0 %v1512
        %2334 = vmatmul.bf16.gmra.mxu0 %v531
        %v2335 = vpop.f32.mrf.mxu0
        %v2336 = vadd.f32 %v2323, %v2335
        %v2337 = vpop.f32.mrf.mxu0
        %2338 = vdwg.mxu0
        %2339 = vmatpush.bf16.msra.mxu0 %v1602
        %2340 = vmatpush.bf16.msra.mxu0 %v1596
        %2341 = vmatpush.bf16.msra.mxu0 %v1590
        %2342 = vmatpush.bf16.msra.mxu0 %v1584
        %2343 = vmatpush.bf16.msra.mxu0 %v1578
        %2344 = vmatpush.bf16.msra.mxu0 %v1572
        %2345 = vmatpush.bf16.msra.mxu0 %v1566
        %2346 = vmatpush.bf16.msra.mxu0 %v1560
        %2347 = vmatmul.bf16.gmra.mxu0 %v532
        %v2348 = vpop.f32.mrf.mxu0
        %v2349 = vadd.f32 %v2336, %v2348
        %v2350 = vpop.f32.mrf.mxu0
        %2351 = vdwg.mxu0
        %2352 = vmatpush.bf16.msra.mxu0 %v1650
        %2353 = vmatpush.bf16.msra.mxu0 %v1644
        %2354 = vmatpush.bf16.msra.mxu0 %v1638
        %2355 = vmatpush.bf16.msra.mxu0 %v1632
        %2356 = vmatpush.bf16.msra.mxu0 %v1626
        %2357 = vmatpush.bf16.msra.mxu0 %v1620
        %2358 = vmatpush.bf16.msra.mxu0 %v1614
        %2359 = vmatpush.bf16.msra.mxu0 %v1608
        %2360 = vmatmul.bf16.gmra.mxu0 %v533
        %v2361 = vpop.f32.mrf.mxu0
        %v2362 = vadd.f32 %v2349, %v2361
        %v2363 = vpop.f32.mrf.mxu0
        %2364 = vdwg.mxu0
        %2365 = vmatpush.bf16.msra.mxu0 %v1698
        %2366 = vmatpush.bf16.msra.mxu0 %v1692
        %2367 = vmatpush.bf16.msra.mxu0 %v1686
        %2368 = vmatpush.bf16.msra.mxu0 %v1680
        %2369 = vmatpush.bf16.msra.mxu0 %v1674
        %2370 = vmatpush.bf16.msra.mxu0 %v1668
        %2371 = vmatpush.bf16.msra.mxu0 %v1662
        %2372 = vmatpush.bf16.msra.mxu0 %v1656
        %2373 = vmatmul.bf16.gmra.mxu0 %v534
        %v2374 = vpop.f32.mrf.mxu0
        %v2375 = vadd.f32 %v2362, %v2374
        %v2376 = vpop.f32.mrf.mxu0
        %2377 = vdwg.mxu0
        %2378 = vmatpush.bf16.msra.mxu0 %v1459
        %2379 = vmatpush.bf16.msra.mxu0 %v1453
        %2380 = vmatpush.bf16.msra.mxu0 %v1447
        %2381 = vmatpush.bf16.msra.mxu0 %v1441
        %2382 = vmatpush.bf16.msra.mxu0 %v1435
        %2383 = vmatpush.bf16.msra.mxu0 %v1429
        %2384 = vmatpush.bf16.msra.mxu0 %v1423
        %2385 = vmatpush.bf16.msra.mxu0 %v1417
        %2386 = vmatmul.bf16.gmra.mxu0 %v529
        %v2387 = vpop.f32.mrf.mxu0
        %v2388 = vadd.f32 %v541, %v2387
        %v2389 = vpop.f32.mrf.mxu0
        %2390 = vdwg.mxu0
        %2391 = vmatpush.bf16.msra.mxu0 %v1507
        %2392 = vmatpush.bf16.msra.mxu0 %v1501
        %2393 = vmatpush.bf16.msra.mxu0 %v1495
        %2394 = vmatpush.bf16.msra.mxu0 %v1489
        %2395 = vmatpush.bf16.msra.mxu0 %v1483
        %2396 = vmatpush.bf16.msra.mxu0 %v1477
        %2397 = vmatpush.bf16.msra.mxu0 %v1471
        %2398 = vmatpush.bf16.msra.mxu0 %v1465
        %2399 = vmatmul.bf16.gmra.mxu0 %v530
        %v2400 = vpop.f32.mrf.mxu0
        %v2401 = vadd.f32 %v2388, %v2400
        %v2402 = vpop.f32.mrf.mxu0
        %2403 = vdwg.mxu0
        %2404 = vmatpush.bf16.msra.mxu0 %v1555
        %2405 = vmatpush.bf16.msra.mxu0 %v1549
        %2406 = vmatpush.bf16.msra.mxu0 %v1543
        %2407 = vmatpush.bf16.msra.mxu0 %v1537
        %2408 = vmatpush.bf16.msra.mxu0 %v1531
        %2409 = vmatpush.bf16.msra.mxu0 %v1525
        %2410 = vmatpush.bf16.msra.mxu0 %v1519
        %2411 = vmatpush.bf16.msra.mxu0 %v1513
        %2412 = vmatmul.bf16.gmra.mxu0 %v531
        %v2413 = vpop.f32.mrf.mxu0
        %v2414 = vadd.f32 %v2401, %v2413
        %v2415 = vpop.f32.mrf.mxu0
        %2416 = vdwg.mxu0
        %2417 = vmatpush.bf16.msra.mxu0 %v1603
        %2418 = vmatpush.bf16.msra.mxu0 %v1597
        %2419 = vmatpush.bf16.msra.mxu0 %v1591
        %2420 = vmatpush.bf16.msra.mxu0 %v1585
        %2421 = vmatpush.bf16.msra.mxu0 %v1579
        %2422 = vmatpush.bf16.msra.mxu0 %v1573
        %2423 = vmatpush.bf16.msra.mxu0 %v1567
        %2424 = vmatpush.bf16.msra.mxu0 %v1561
        %2425 = vmatmul.bf16.gmra.mxu0 %v532
        %v2426 = vpop.f32.mrf.mxu0
        %v2427 = vadd.f32 %v2414, %v2426
        %v2428 = vpop.f32.mrf.mxu0
        %2429 = vdwg.mxu0
        %2430 = vmatpush.bf16.msra.mxu0 %v1651
        %2431 = vmatpush.bf16.msra.mxu0 %v1645
        %2432 = vmatpush.bf16.msra.mxu0 %v1639
        %2433 = vmatpush.bf16.msra.mxu0 %v1633
        %2434 = vmatpush.bf16.msra.mxu0 %v1627
        %2435 = vmatpush.bf16.msra.mxu0 %v1621
        %2436 = vmatpush.bf16.msra.mxu0 %v1615
        %2437 = vmatpush.bf16.msra.mxu0 %v1609
        %2438 = vmatmul.bf16.gmra.mxu0 %v533
        %v2439 = vpop.f32.mrf.mxu0
        %v2440 = vadd.f32 %v2427, %v2439
        %v2441 = vpop.f32.mrf.mxu0
        %2442 = vdwg.mxu0
        %2443 = vmatpush.bf16.msra.mxu0 %v1699
        %2444 = vmatpush.bf16.msra.mxu0 %v1693
        %2445 = vmatpush.bf16.msra.mxu0 %v1687
        %2446 = vmatpush.bf16.msra.mxu0 %v1681
        %2447 = vmatpush.bf16.msra.mxu0 %v1675
        %2448 = vmatpush.bf16.msra.mxu0 %v1669
        %2449 = vmatpush.bf16.msra.mxu0 %v1663
        %2450 = vmatpush.bf16.msra.mxu0 %v1657
        %2451 = vmatmul.bf16.gmra.mxu0 %v534
        %v2452 = vpop.f32.mrf.mxu0
        %v2453 = vadd.f32 %v2440, %v2452
        %v2454 = vpop.f32.mrf.mxu0
        %2455 = vdwg.mxu0
        %p2456 = scmp.lt.s32.totalorder %s21, 3
        // Predicated region
        $region45: #{sudoku_mlp_forward.1} parent=31 // pred_check
          %p2457 = pneg %p2456
        $region46: #{sudoku_mlp_forward.1} parent=31 // pred_check_branch
          %2459 = sbr.rel (%p2457) target = $region48
        $region47: #{sudoku_mlp_forward.1} parent=31 // pred_region
          %v2460 = vmax.f32 %v2063, 0.0
          %v2461 = vmax.f32 %v2141, 0.0
          %v2462 = vmax.f32 %v2219, 0.0
          %v2463 = vmax.f32 %v2297, 0.0
          %v2464 = vmax.f32 %v2375, 0.0
          %v2465 = vmax.f32 %v2453, 0.0
          %2466 = vst [vmem:[#allocation2] sm:$0xff] %v2460
          %2467 = vst [vmem:[#allocation2 + $0x8] sm:$0xff] %v2461
          %2468 = vst [vmem:[#allocation2 + $0x10] sm:$0xff] %v2462
          %2469 = vst [vmem:[#allocation2 + $0x18] sm:$0xff] %v2463
          %2470 = vst [vmem:[#allocation2 + $0x20] sm:$0xff] %v2464
          %2471 = vst [vmem:[#allocation2 + $0x28] sm:$0xff] %v2465
        $region48: #{sudoku_mlp_forward.1} parent=31 // pred_fallthru
          _
        %p2472 = scmp.eq.s32.totalorder %s21, 3
        // Predicated region
        $region49: #{sudoku_mlp_forward.1} parent=31 // pred_check
          %p2473 = pneg %p2472
        $region50: #{sudoku_mlp_forward.1} parent=31 // pred_check_branch
          %2475 = sbr.rel (%p2473) target = $region52
        $region51: #{sudoku_mlp_forward.1} parent=31 // pred_region
          %2476 = vst [vmem:[#allocation8] sm:$0xff] %v2063
          %2477 = vst [vmem:[#allocation8 + $0x8] sm:$0xff] %v2141
          %2478 = vst [vmem:[#allocation8 + $0x10] sm:$0xff] %v2219
          %2479 = vst [vmem:[#allocation8 + $0x18] sm:$0xff] %v2297
          %2480 = vst [vmem:[#allocation8 + $0x20] sm:$0xff] %v2375
          %2481 = vst [vmem:[#allocation8 + $0x28] sm:$0xff] %v2453
        $region52: #{sudoku_mlp_forward.1} parent=31 // pred_fallthru
          _
        // Predicated region
        $region53: #{sudoku_mlp_forward.1} parent=31 // pred_check
          %p2482 = pneg %p107
        $region54: #{sudoku_mlp_forward.1} parent=31 // pred_check_branch
          %2484 = sbr.rel (%p2482) target = $region56
        $region55: #{sudoku_mlp_forward.1} parent=31 // pred_region
          %2486 = vsyncadd [#allocation5], 0
          %s2488 = sshll.u32 [#allocation8], 4
          %s2489 = int_to_ptr.vmem [resolvable:$true] %s2488
          %s2490 = sshll.u32 %s3, 4
          %s2491 = int_to_ptr.hbm [resolvable:$true] %s2490
          %2493 = dma.vmem_to_hbm [thread:$0]  %s2489, 768, %s2491, [#allocation5]
        $region56: #{sudoku_mlp_forward.1} parent=31 // pred_fallthru
          _
        // Predicated region
        $region57: #{sudoku_mlp_forward.1} parent=31 // pred_check
          %p2494 = pneg %p107
        $region58: #{sudoku_mlp_forward.1} parent=31 // pred_check_branch
          %2496 = sbr.rel (%p2494) target = $region60
        $region59: #{sudoku_mlp_forward.1} parent=31 // pred_region
          %2498 = dma.done [#allocation5], 768
        $region60: #{sudoku_mlp_forward.1} parent=31 // pred_fallthru
          _
      $region32: #{sudoku_mlp_forward.1} parent=5 // pred_fallthru
        _
      %p2499 = scmp.le.s32.totalorder 2, %s16
      // Predicated region
      $region61: #{sudoku_mlp_forward.1} parent=5 // pred_check
        %p2500 = pneg %p2499
      $region62: #{sudoku_mlp_forward.1} parent=5 // pred_check_branch
        %2502 = sbr.rel (%p2500) target = $region64
      $region63: #{sudoku_mlp_forward.1} parent=5 // pred_region
        %s2503 = ssub.s32 %s16, 2
      $region64: #{sudoku_mlp_forward.1} parent=5 // pred_fallthru
        _
    $region6: #{sudoku_mlp_forward.1} parent=1 // loop_footer
      %s20 = sadd.s32 1, %s16
    $region7: #{sudoku_mlp_forward.1} parent=1 // loop_footer_branch
      %15 = sbr.rel target = $region3
    $region8: #{sudoku_mlp_forward.1} parent=1 // loop_exit
      _
    %2504 = vsyncpa [#allocation4], 1
    %s2505 = scalar_lea.sflag [#allocation4], 1
    %2506 = vsyncpa %s2505, 1
    %2507 = vsyncpa [#allocation7], 1
    %s2508 = scalar_lea.sflag [#allocation7], 1
    %2509 = vsyncpa %s2508, 1
    %2510 = vsyncpa [#allocation5], 1
    %s2511 = scalar_lea.sflag [#allocation5], 1
    %2512 = vsyncpa %s2511, 1

</llo_original>
